<compile_context>
chip_gen: v5e
topology: v5e:2x2
jax: 0.10.0
libtpu: 0.0.40
codegen_flags: <defaults>
</compile_context>

<pallas_src>
import functools

import jax
import jax.numpy as jnp
from jax.experimental import pallas as pl
from jax.experimental.pallas import tpu as pltpu


def _round_up(x, m):
    return (x + m - 1) // m * m


def _cdiv(a, b):
    return -(-a // b)


def _update_kernel(x_ref, wab_ref, w1_ref, b1_ref, w2_ref, b2_ref, out_ref):
    f32 = jnp.float32
    bf16 = jnp.bfloat16
    F = wab_ref.shape[0] // 6

    x = x_ref[...]                                # (TB, 8F) f32
    vs_pack = x[:, 0:3 * F]                       # [vs0|vs1|vs2]
    vu_pack = x[:, 3 * F:6 * F]                   # [vu0|vu1|vu2]
    ss = x[:, 6 * F:7 * F]
    su = x[:, 7 * F:8 * F]

    # --- A/B projections: one block-diagonal (TB,6F)@(6F,6F) bf16 MXU matmul --
    proj = jnp.dot(x[:, 0:6 * F].astype(bf16), wab_ref[...],
                   preferred_element_type=f32)    # (TB,6F) = [vsA0..2 | vuB0..2]
    vsA_pack = proj[:, 0:3 * F]
    vuB_pack = proj[:, 3 * F:6 * F]

    # --- lane-packed squared norms / dot products (f32 VPU) --------------------
    def gsum(p):                                  # (TB,3F) -> (TB,F): sum 3 lane groups
        return p[:, 0:F] + p[:, F:2 * F] + p[:, 2 * F:3 * F]

    norm0 = jnp.sqrt(gsum(vs_pack * vs_pack))
    norm1 = jnp.sqrt(gsum(vu_pack * vu_pack))
    norm2 = jnp.sqrt(gsum(vsA_pack * vsA_pack))
    norm3 = jnp.sqrt(gsum(vuB_pack * vuB_pack))
    mul0 = gsum(vs_pack * vu_pack)
    mul1 = gsum(vs_pack * vuB_pack)
    mul2 = gsum(vsA_pack * vu_pack)
    mul3 = gsum(vsA_pack * vuB_pack)

    # component views for the cross products and the gating epilogue
    vs = [vs_pack[:, c * F:(c + 1) * F] for c in range(3)]
    vu = [vu_pack[:, c * F:(c + 1) * F] for c in range(3)]
    vsA = [vsA_pack[:, c * F:(c + 1) * F] for c in range(3)]
    vuB = [vuB_pack[:, c * F:(c + 1) * F] for c in range(3)]

    def cross_sq(a, b):
        c0 = a[1] * b[2] - a[2] * b[1]
        c1 = a[2] * b[0] - a[0] * b[2]
        c2 = a[0] * b[1] - a[1] * b[0]
        return c0 * c0 + c1 * c1 + c2 * c2

    cross0n = cross_sq(vs, vu)
    cross2n = cross_sq(vsA, vu)

    # --- MLP layer 1: single fused K=12F bf16 matmul ---------------------------
    feats = jnp.concatenate([norm0, norm1, norm2, norm3, cross0n, cross2n,
                             mul0, mul1, mul2, mul3, ss, su], axis=-1)  # (TB,12F)
    h = jnp.dot(feats.astype(bf16), w1_ref[...],
                preferred_element_type=f32) + b1_ref[...]
    h = h * jax.nn.sigmoid(h)                     # SiLU (f32)

    # --- MLP layer 2: full 16F output (lane-aligned N=512 at F=32) -------------
    gates = jnp.dot(h.astype(bf16), w2_ref[...],
                    preferred_element_type=f32) + b2_ref[...]           # (TB,16F)

    def g(j):
        return gates[:, j * F:(j + 1) * F]

    g_vsA, g_vu, g_vuB = g(0), g(1), g(2)
    nv = [vs[c] + g_vsA * vsA[c] + g_vu * vu[c] + g_vuB * vuB[c] for c in range(3)]
    ns = (ss + g(3) * su
          + g(4) * norm0 + g(5) * norm1 + g(6) * norm2 + g(7) * norm3
          + g(8) * cross0n + g(10) * cross2n
          + g(12) * mul0 + g(13) * mul1 + g(14) * mul2 + g(15) * mul3)

    # --- single lane-dense (TB, 4F=128) store ----------------------------------
    out_ref[...] = jnp.concatenate([ns, nv[0], nv[1], nv[2]], axis=-1)


@functools.partial(jax.jit, static_argnames=("tb",))
def deepdf_update_extended(scalar_state, vector_state, scalar_upd, vector_upd,
                           params, tb=512):
    """scalar_*: (B, 1, F); vector_*: (B, 3, F).  Returns (new_scalar, new_vector)."""
    waT, wbT, w1T, b1, w2T, b2 = params
    B, _, F = vector_state.shape
    f32, bf = jnp.float32, jnp.bfloat16

    # Fused lane-dense input: (B, 8F) = [vs0 vs1 vs2 | vu0 vu1 vu2 | ss | su]
    x = jnp.concatenate([
        vector_state.reshape(B, 3 * F),
        vector_upd.reshape(B, 3 * F),
        scalar_state.reshape(B, F),
        scalar_upd.reshape(B, F),
    ], axis=-1).astype(f32)

    # Batch tile: large (amortize per-step overhead, fill MXU M); on multi-TC
    # chips (v7x) clamp so the grid has >= 2 steps for ("parallel",) sharding.
    try:
        kind = jax.devices()[0].device_kind.lower()
    except Exception:
        kind = ""
    min_steps = 2 if "v7" in kind else 1
    Bp8 = _round_up(B, 8)
    tb_eff = min(_round_up(max(tb, 8), 8), _round_up(_cdiv(Bp8, min_steps), 8))
    Bp = _round_up(B, tb_eff)
    if Bp != B:
        x = jnp.pad(x, ((0, Bp - B), (0, 0)))

    # Weights: bf16 MXU operands (f32 accumulation in-kernel); biases stay f32.
    Z = jnp.zeros((F, F), waT.dtype)

    def _row(blks):
        return jnp.concatenate(blks, axis=1)

    wab = jnp.concatenate([
        _row([waT, Z, Z, Z, Z, Z]),
        _row([Z, waT, Z, Z, Z, Z]),
        _row([Z, Z, waT, Z, Z, Z]),
        _row([Z, Z, Z, wbT, Z, Z]),
        _row([Z, Z, Z, Z, wbT, Z]),
        _row([Z, Z, Z, Z, Z, wbT]),
    ], axis=0).astype(bf)                             # (6F, 6F) block-diagonal
    w1_b = w1T.astype(bf)                             # (12F, 8F)
    w2_b = w2T.astype(bf)                             # (8F, 16F)
    b1_f = b1.astype(f32)                             # (1, 8F)
    b2_f = b2.astype(f32)                             # (1, 16F)

    def const_spec(a):
        nd = a.ndim
        return pl.BlockSpec(a.shape, lambda i, _nd=nd: (0,) * _nd)

    out = pl.pallas_call(
        _update_kernel,
        out_shape=jax.ShapeDtypeStruct((Bp, 4 * F), jnp.float32),
        grid_spec=pltpu.PrefetchScalarGridSpec(
            num_scalar_prefetch=0,
            grid=(Bp // tb_eff,),
            in_specs=[pl.BlockSpec((tb_eff, 8 * F), lambda i: (i, 0)),
                      const_spec(wab), const_spec(w1_b), const_spec(b1_f),
                      const_spec(w2_b), const_spec(b2_f)],
            out_specs=pl.BlockSpec((tb_eff, 4 * F), lambda i: (i, 0)),
        ),
        compiler_params=pltpu.CompilerParams(
            dimension_semantics=("parallel",),
            vmem_limit_bytes=32 * 1024 * 1024),
    )(x, wab, w1_b, b1_f, w2_b, b2_f)

    out = out[:B]
    new_scalar = out[:, :F].reshape(B, 1, F)
    new_vector = out[:, F:].reshape(B, 3, F)
    return new_scalar, new_vector


def init_params(key, F):
    """PyTorch-style uniform(-1/sqrt(fan_in), 1/sqrt(fan_in)) init; weights
    already transposed to (in, out) layout for x @ W."""
    ks = jax.random.split(key, 6)

    def lin(k, fan_in, fan_out, bias):
        bound = 1.0 / jnp.sqrt(fan_in)
        kw, kb = jax.random.split(k)
        w = jax.random.uniform(kw, (fan_in, fan_out), jnp.float32, -bound, bound)
        if not bias:
            return w, None
        b = jax.random.uniform(kb, (1, fan_out), jnp.float32, -bound, bound)
        return w, b

    waT, _ = lin(ks[0], F, F, bias=False)
    wbT, _ = lin(ks[1], F, F, bias=False)
    w1T, b1 = lin(ks[2], 12 * F, 8 * F, bias=True)
    w2T, b2 = lin(ks[3], 8 * F, 16 * F, bias=True)
    return waT, wbT, w1T, b1, w2T, b2


def reference(scalar_state, vector_state, scalar_upd, vector_upd, params):
    """Pure-JAX mirror of the PyTorch forward with the same bf16 matmul
    operands / f32 accumulation as the kernel (for tight tolerance checks)."""
    waT, wbT, w1T, b1, w2T, b2 = params
    F = waT.shape[0]
    bf = jnp.bfloat16

    def mm(x, w):
        return jnp.dot(x.astype(bf), w.astype(bf),
                       preferred_element_type=jnp.float32)

    vs2 = mm(vector_state, waT)
    vu2 = mm(vector_upd, wbT)

    def nrm(v):
        return jnp.sqrt(jnp.sum(v * v, axis=-2, keepdims=True))

    norm0, norm1 = nrm(vector_state), nrm(vector_upd)
    norm2, norm3 = nrm(vs2), nrm(vu2)
    cross0 = jnp.cross(vector_state, vector_upd, axis=-2)
    cross2 = jnp.cross(vs2, vector_upd, axis=-2)
    cross0_n = jnp.sum(cross0 * cross0, axis=-2, keepdims=True)
    cross2_n = jnp.sum(cross2 * cross2, axis=-2, keepdims=True)
    mul0 = jnp.sum(vector_state * vector_upd, axis=-2, keepdims=True)
    mul1 = jnp.sum(vector_state * vu2, axis=-2, keepdims=True)
    mul2 = jnp.sum(vs2 * vector_upd, axis=-2, keepdims=True)
    mul3 = jnp.sum(vs2 * vu2, axis=-2, keepdims=True)
    feats = jnp.concatenate([norm0, norm1, norm2, norm3, cross0_n, cross2_n,
                             mul0, mul1, mul2, mul3, scalar_state, scalar_upd],
                            axis=-1)
    h = mm(feats, w1T) + b1
    h = h * jax.nn.sigmoid(h)
    gates = mm(h, w2T) + b2
    gs = [gates[..., i * F:(i + 1) * F] for i in range(16)]
    new_vector = vector_state + gs[0] * vs2 + gs[1] * vector_upd + gs[2] * vu2
    new_scalar = (scalar_state + gs[3] * scalar_upd
                  + gs[4] * norm0 + gs[5] * norm1 + gs[6] * norm2 + gs[7] * norm3
                  + gs[8] * cross0_n + gs[10] * cross2_n
                  + gs[12] * mul0 + gs[13] * mul1 + gs[14] * mul2 + gs[15] * mul3)
    return new_scalar, new_vector


if __name__ == "__main__":
    F = 32   # inout_features
    B = 16   # batch rows (small demo shape)

    key = jax.random.PRNGKey(0)
    kp, k1, k2, k3, k4 = jax.random.split(key, 5)

    params = init_params(kp, F)
    scalar_state = jax.random.normal(k1, (B, 1, F), jnp.float32)
    vector_state = jax.random.normal(k2, (B, 3, F), jnp.float32)
    scalar_upd = jax.random.normal(k3, (B, 1, F), jnp.float32)
    vector_upd = jax.random.normal(k4, (B, 3, F), jnp.float32)

    new_scalar, new_vector = deepdf_update_extended(
        scalar_state, vector_state, scalar_upd, vector_upd, params)
    jax.block_until_ready((new_scalar, new_vector))

    ref_scalar, ref_vector = reference(
        scalar_state, vector_state, scalar_upd, vector_upd, params)
    assert new_scalar.shape == (B, 1, F) and new_vector.shape == (B, 3, F)
    assert jnp.allclose(new_scalar, ref_scalar, atol=5e-3, rtol=5e-3), \
        float(jnp.max(jnp.abs(new_scalar - ref_scalar)))
    assert jnp.allclose(new_vector, ref_vector, atol=5e-3, rtol=5e-3), \
        float(jnp.max(jnp.abs(new_vector - ref_vector)))

    print("KERNEL_OK")
</pallas_src>

<mosaic_0001>
module attributes {stable_mosaic.version = 11 : i64} {
  func.func @_update_kernel(%arg0: i32, %arg1: memref<16x256xf32, #tpu.memory_space<vmem>>, %arg2: memref<192x192xbf16, #tpu.memory_space<vmem>>, %arg3: memref<384x256xbf16, #tpu.memory_space<vmem>>, %arg4: memref<1x256xf32, #tpu.memory_space<vmem>>, %arg5: memref<256x512xbf16, #tpu.memory_space<vmem>>, %arg6: memref<1x512xf32, #tpu.memory_space<vmem>>, %arg7: memref<16x128xf32, #tpu.memory_space<vmem>>) attributes {dimension_semantics = [#tpu.dimension_semantics<parallel>], iteration_bounds = array<i64: 1>, scalar_prefetch = 0 : i64, scratch_operands = 0 : i64, tpu.core_type = #tpu.core_type<tc>, window_params = [{transform_indices = @transform_0, window_bounds = array<i64: 16, 256>}, {pipeline_mode = #tpu.pipeline_mode<synchronous>, transform_indices = @transform_1, window_bounds = array<i64: 192, 192>}, {pipeline_mode = #tpu.pipeline_mode<synchronous>, transform_indices = @transform_2, window_bounds = array<i64: 384, 256>}, {pipeline_mode = #tpu.pipeline_mode<synchronous>, transform_indices = @transform_3, window_bounds = array<i64: 1, 256>}, {pipeline_mode = #tpu.pipeline_mode<synchronous>, transform_indices = @transform_4, window_bounds = array<i64: 256, 512>}, {pipeline_mode = #tpu.pipeline_mode<synchronous>, transform_indices = @transform_5, window_bounds = array<i64: 1, 512>}, {transform_indices = @transform_6, window_bounds = array<i64: 16, 128>}]} {
    %c0 = arith.constant 0 : index
    %c0_0 = arith.constant 0 : index
    %0 = vector.load %arg1[%c0, %c0_0] : memref<16x256xf32, #tpu.memory_space<vmem>>, vector<16x256xf32>
    %1 = vector.extract_strided_slice %0 {offsets = [0, 0], sizes = [16, 96], strides = [1, 1]} : vector<16x256xf32> to vector<16x96xf32>
    %2 = vector.extract_strided_slice %0 {offsets = [0, 96], sizes = [16, 96], strides = [1, 1]} : vector<16x256xf32> to vector<16x96xf32>
    %3 = vector.extract_strided_slice %0 {offsets = [0, 192], sizes = [16, 32], strides = [1, 1]} : vector<16x256xf32> to vector<16x32xf32>
    %4 = vector.extract_strided_slice %0 {offsets = [0, 224], sizes = [16, 32], strides = [1, 1]} : vector<16x256xf32> to vector<16x32xf32>
    %5 = vector.extract_strided_slice %0 {offsets = [0, 0], sizes = [16, 192], strides = [1, 1]} : vector<16x256xf32> to vector<16x192xf32>
    %6 = arith.truncf %5 : vector<16x192xf32> to vector<16x192xbf16>
    %c0_1 = arith.constant 0 : index
    %c0_2 = arith.constant 0 : index
    %7 = vector.load %arg2[%c0_1, %c0_2] : memref<192x192xbf16, #tpu.memory_space<vmem>>, vector<192x192xbf16>
    %cst = arith.constant dense<0.000000e+00> : vector<16x192xf32>
    %8 = tpu.matmul %6, %7, %cst {dimension_numbers = #tpu.dot_dimension_numbers<[1], [0], [0], [1], [0, 0, 1, 1], [], []>} : vector<16x192xbf16>, vector<192x192xbf16>, vector<16x192xf32> -> vector<16x192xf32>
    %9 = vector.extract_strided_slice %8 {offsets = [0, 0], sizes = [16, 96], strides = [1, 1]} : vector<16x192xf32> to vector<16x96xf32>
    %10 = vector.extract_strided_slice %8 {offsets = [0, 96], sizes = [16, 96], strides = [1, 1]} : vector<16x192xf32> to vector<16x96xf32>
    %11 = arith.mulf %1, %1 : vector<16x96xf32>
    %12 = vector.extract_strided_slice %11 {offsets = [0, 0], sizes = [16, 32], strides = [1, 1]} : vector<16x96xf32> to vector<16x32xf32>
    %13 = vector.extract_strided_slice %11 {offsets = [0, 32], sizes = [16, 32], strides = [1, 1]} : vector<16x96xf32> to vector<16x32xf32>
    %14 = arith.addf %12, %13 : vector<16x32xf32>
    %15 = vector.extract_strided_slice %11 {offsets = [0, 64], sizes = [16, 32], strides = [1, 1]} : vector<16x96xf32> to vector<16x32xf32>
    %16 = arith.addf %14, %15 : vector<16x32xf32>
    %17 = math.sqrt %16 : vector<16x32xf32>
    %18 = arith.mulf %2, %2 : vector<16x96xf32>
    %19 = vector.extract_strided_slice %18 {offsets = [0, 0], sizes = [16, 32], strides = [1, 1]} : vector<16x96xf32> to vector<16x32xf32>
    %20 = vector.extract_strided_slice %18 {offsets = [0, 32], sizes = [16, 32], strides = [1, 1]} : vector<16x96xf32> to vector<16x32xf32>
    %21 = arith.addf %19, %20 : vector<16x32xf32>
    %22 = vector.extract_strided_slice %18 {offsets = [0, 64], sizes = [16, 32], strides = [1, 1]} : vector<16x96xf32> to vector<16x32xf32>
    %23 = arith.addf %21, %22 : vector<16x32xf32>
    %24 = math.sqrt %23 : vector<16x32xf32>
    %25 = arith.mulf %9, %9 : vector<16x96xf32>
    %26 = vector.extract_strided_slice %25 {offsets = [0, 0], sizes = [16, 32], strides = [1, 1]} : vector<16x96xf32> to vector<16x32xf32>
    %27 = vector.extract_strided_slice %25 {offsets = [0, 32], sizes = [16, 32], strides = [1, 1]} : vector<16x96xf32> to vector<16x32xf32>
    %28 = arith.addf %26, %27 : vector<16x32xf32>
    %29 = vector.extract_strided_slice %25 {offsets = [0, 64], sizes = [16, 32], strides = [1, 1]} : vector<16x96xf32> to vector<16x32xf32>
    %30 = arith.addf %28, %29 : vector<16x32xf32>
    %31 = math.sqrt %30 : vector<16x32xf32>
    %32 = arith.mulf %10, %10 : vector<16x96xf32>
    %33 = vector.extract_strided_slice %32 {offsets = [0, 0], sizes = [16, 32], strides = [1, 1]} : vector<16x96xf32> to vector<16x32xf32>
    %34 = vector.extract_strided_slice %32 {offsets = [0, 32], sizes = [16, 32], strides = [1, 1]} : vector<16x96xf32> to vector<16x32xf32>
    %35 = arith.addf %33, %34 : vector<16x32xf32>
    %36 = vector.extract_strided_slice %32 {offsets = [0, 64], sizes = [16, 32], strides = [1, 1]} : vector<16x96xf32> to vector<16x32xf32>
    %37 = arith.addf %35, %36 : vector<16x32xf32>
    %38 = math.sqrt %37 : vector<16x32xf32>
    %39 = arith.mulf %1, %2 : vector<16x96xf32>
    %40 = vector.extract_strided_slice %39 {offsets = [0, 0], sizes = [16, 32], strides = [1, 1]} : vector<16x96xf32> to vector<16x32xf32>
    %41 = vector.extract_strided_slice %39 {offsets = [0, 32], sizes = [16, 32], strides = [1, 1]} : vector<16x96xf32> to vector<16x32xf32>
    %42 = arith.addf %40, %41 : vector<16x32xf32>
    %43 = vector.extract_strided_slice %39 {offsets = [0, 64], sizes = [16, 32], strides = [1, 1]} : vector<16x96xf32> to vector<16x32xf32>
    %44 = arith.addf %42, %43 : vector<16x32xf32>
    %45 = arith.mulf %1, %10 : vector<16x96xf32>
    %46 = vector.extract_strided_slice %45 {offsets = [0, 0], sizes = [16, 32], strides = [1, 1]} : vector<16x96xf32> to vector<16x32xf32>
    %47 = vector.extract_strided_slice %45 {offsets = [0, 32], sizes = [16, 32], strides = [1, 1]} : vector<16x96xf32> to vector<16x32xf32>
    %48 = arith.addf %46, %47 : vector<16x32xf32>
    %49 = vector.extract_strided_slice %45 {offsets = [0, 64], sizes = [16, 32], strides = [1, 1]} : vector<16x96xf32> to vector<16x32xf32>
    %50 = arith.addf %48, %49 : vector<16x32xf32>
    %51 = arith.mulf %9, %2 : vector<16x96xf32>
    %52 = vector.extract_strided_slice %51 {offsets = [0, 0], sizes = [16, 32], strides = [1, 1]} : vector<16x96xf32> to vector<16x32xf32>
    %53 = vector.extract_strided_slice %51 {offsets = [0, 32], sizes = [16, 32], strides = [1, 1]} : vector<16x96xf32> to vector<16x32xf32>
    %54 = arith.addf %52, %53 : vector<16x32xf32>
    %55 = vector.extract_strided_slice %51 {offsets = [0, 64], sizes = [16, 32], strides = [1, 1]} : vector<16x96xf32> to vector<16x32xf32>
    %56 = arith.addf %54, %55 : vector<16x32xf32>
    %57 = arith.mulf %9, %10 : vector<16x96xf32>
    %58 = vector.extract_strided_slice %57 {offsets = [0, 0], sizes = [16, 32], strides = [1, 1]} : vector<16x96xf32> to vector<16x32xf32>
    %59 = vector.extract_strided_slice %57 {offsets = [0, 32], sizes = [16, 32], strides = [1, 1]} : vector<16x96xf32> to vector<16x32xf32>
    %60 = arith.addf %58, %59 : vector<16x32xf32>
    %61 = vector.extract_strided_slice %57 {offsets = [0, 64], sizes = [16, 32], strides = [1, 1]} : vector<16x96xf32> to vector<16x32xf32>
    %62 = arith.addf %60, %61 : vector<16x32xf32>
    %63 = vector.extract_strided_slice %1 {offsets = [0, 0], sizes = [16, 32], strides = [1, 1]} : vector<16x96xf32> to vector<16x32xf32>
    %64 = vector.extract_strided_slice %1 {offsets = [0, 32], sizes = [16, 32], strides = [1, 1]} : vector<16x96xf32> to vector<16x32xf32>
    %65 = vector.extract_strided_slice %1 {offsets = [0, 64], sizes = [16, 32], strides = [1, 1]} : vector<16x96xf32> to vector<16x32xf32>
    %66 = vector.extract_strided_slice %2 {offsets = [0, 0], sizes = [16, 32], strides = [1, 1]} : vector<16x96xf32> to vector<16x32xf32>
    %67 = vector.extract_strided_slice %2 {offsets = [0, 32], sizes = [16, 32], strides = [1, 1]} : vector<16x96xf32> to vector<16x32xf32>
    %68 = vector.extract_strided_slice %2 {offsets = [0, 64], sizes = [16, 32], strides = [1, 1]} : vector<16x96xf32> to vector<16x32xf32>
    %69 = vector.extract_strided_slice %9 {offsets = [0, 0], sizes = [16, 32], strides = [1, 1]} : vector<16x96xf32> to vector<16x32xf32>
    %70 = vector.extract_strided_slice %9 {offsets = [0, 32], sizes = [16, 32], strides = [1, 1]} : vector<16x96xf32> to vector<16x32xf32>
    %71 = vector.extract_strided_slice %9 {offsets = [0, 64], sizes = [16, 32], strides = [1, 1]} : vector<16x96xf32> to vector<16x32xf32>
    %72 = vector.extract_strided_slice %10 {offsets = [0, 0], sizes = [16, 32], strides = [1, 1]} : vector<16x96xf32> to vector<16x32xf32>
    %73 = vector.extract_strided_slice %10 {offsets = [0, 32], sizes = [16, 32], strides = [1, 1]} : vector<16x96xf32> to vector<16x32xf32>
    %74 = vector.extract_strided_slice %10 {offsets = [0, 64], sizes = [16, 32], strides = [1, 1]} : vector<16x96xf32> to vector<16x32xf32>
    %75 = arith.mulf %64, %68 : vector<16x32xf32>
    %76 = arith.mulf %65, %67 : vector<16x32xf32>
    %77 = arith.subf %75, %76 : vector<16x32xf32>
    %78 = arith.mulf %65, %66 : vector<16x32xf32>
    %79 = arith.mulf %63, %68 : vector<16x32xf32>
    %80 = arith.subf %78, %79 : vector<16x32xf32>
    %81 = arith.mulf %63, %67 : vector<16x32xf32>
    %82 = arith.mulf %64, %66 : vector<16x32xf32>
    %83 = arith.subf %81, %82 : vector<16x32xf32>
    %84 = arith.mulf %77, %77 : vector<16x32xf32>
    %85 = arith.mulf %80, %80 : vector<16x32xf32>
    %86 = arith.addf %84, %85 : vector<16x32xf32>
    %87 = arith.mulf %83, %83 : vector<16x32xf32>
    %88 = arith.addf %86, %87 : vector<16x32xf32>
    %89 = arith.mulf %70, %68 : vector<16x32xf32>
    %90 = arith.mulf %71, %67 : vector<16x32xf32>
    %91 = arith.subf %89, %90 : vector<16x32xf32>
    %92 = arith.mulf %71, %66 : vector<16x32xf32>
    %93 = arith.mulf %69, %68 : vector<16x32xf32>
    %94 = arith.subf %92, %93 : vector<16x32xf32>
    %95 = arith.mulf %69, %67 : vector<16x32xf32>
    %96 = arith.mulf %70, %66 : vector<16x32xf32>
    %97 = arith.subf %95, %96 : vector<16x32xf32>
    %98 = arith.mulf %91, %91 : vector<16x32xf32>
    %99 = arith.mulf %94, %94 : vector<16x32xf32>
    %100 = arith.addf %98, %99 : vector<16x32xf32>
    %101 = arith.mulf %97, %97 : vector<16x32xf32>
    %102 = arith.addf %100, %101 : vector<16x32xf32>
    %103 = tpu.concatenate %17, %24, %31, %38, %88, %102, %44, %50, %56, %62, %3, %4 in 1 : vector<16x32xf32>, vector<16x32xf32>, vector<16x32xf32>, vector<16x32xf32>, vector<16x32xf32>, vector<16x32xf32>, vector<16x32xf32>, vector<16x32xf32>, vector<16x32xf32>, vector<16x32xf32>, vector<16x32xf32>, vector<16x32xf32> -> vector<16x384xf32>
    %104 = arith.truncf %103 : vector<16x384xf32> to vector<16x384xbf16>
    %c0_3 = arith.constant 0 : index
    %c0_4 = arith.constant 0 : index
    %105 = vector.load %arg3[%c0_3, %c0_4] : memref<384x256xbf16, #tpu.memory_space<vmem>>, vector<384x256xbf16>
    %cst_5 = arith.constant dense<0.000000e+00> : vector<16x256xf32>
    %106 = tpu.matmul %104, %105, %cst_5 {dimension_numbers = #tpu.dot_dimension_numbers<[1], [0], [0], [1], [0, 0, 1, 1], [], []>} : vector<16x384xbf16>, vector<384x256xbf16>, vector<16x256xf32> -> vector<16x256xf32>
    %c0_6 = arith.constant 0 : index
    %c0_7 = arith.constant 0 : index
    %107 = vector.load %arg4[%c0_6, %c0_7] : memref<1x256xf32, #tpu.memory_space<vmem>>, vector<1x256xf32>
    %108 = vector.broadcast %107 : vector<1x256xf32> to vector<16x256xf32>
    %109 = arith.addf %106, %108 : vector<16x256xf32>
    %110 = arith.negf %109 : vector<16x256xf32>
    %111 = math.exp %110 : vector<16x256xf32>
    %cst_8 = arith.constant 1.000000e+00 : f32
    %112 = vector.broadcast %cst_8 : f32 to vector<16x256xf32>
    %113 = arith.addf %112, %111 : vector<16x256xf32>
    %114 = arith.divf %112, %113 : vector<16x256xf32>
    %115 = arith.mulf %109, %114 : vector<16x256xf32>
    %116 = arith.truncf %115 : vector<16x256xf32> to vector<16x256xbf16>
    %c0_9 = arith.constant 0 : index
    %c0_10 = arith.constant 0 : index
    %117 = vector.load %arg5[%c0_9, %c0_10] : memref<256x512xbf16, #tpu.memory_space<vmem>>, vector<256x512xbf16>
    %cst_11 = arith.constant dense<0.000000e+00> : vector<16x512xf32>
    %118 = tpu.matmul %116, %117, %cst_11 {dimension_numbers = #tpu.dot_dimension_numbers<[1], [0], [0], [1], [0, 0, 1, 1], [], []>} : vector<16x256xbf16>, vector<256x512xbf16>, vector<16x512xf32> -> vector<16x512xf32>
    %c0_12 = arith.constant 0 : index
    %c0_13 = arith.constant 0 : index
    %119 = vector.load %arg6[%c0_12, %c0_13] : memref<1x512xf32, #tpu.memory_space<vmem>>, vector<1x512xf32>
    %120 = vector.broadcast %119 : vector<1x512xf32> to vector<16x512xf32>
    %121 = arith.addf %118, %120 : vector<16x512xf32>
    %122 = vector.extract_strided_slice %121 {offsets = [0, 0], sizes = [16, 32], strides = [1, 1]} : vector<16x512xf32> to vector<16x32xf32>
    %123 = vector.extract_strided_slice %121 {offsets = [0, 32], sizes = [16, 32], strides = [1, 1]} : vector<16x512xf32> to vector<16x32xf32>
    %124 = vector.extract_strided_slice %121 {offsets = [0, 64], sizes = [16, 32], strides = [1, 1]} : vector<16x512xf32> to vector<16x32xf32>
    %125 = arith.mulf %122, %69 : vector<16x32xf32>
    %126 = arith.addf %63, %125 : vector<16x32xf32>
    %127 = arith.mulf %123, %66 : vector<16x32xf32>
    %128 = arith.addf %126, %127 : vector<16x32xf32>
    %129 = arith.mulf %124, %72 : vector<16x32xf32>
    %130 = arith.addf %128, %129 : vector<16x32xf32>
    %131 = arith.mulf %122, %70 : vector<16x32xf32>
    %132 = arith.addf %64, %131 : vector<16x32xf32>
    %133 = arith.mulf %123, %67 : vector<16x32xf32>
    %134 = arith.addf %132, %133 : vector<16x32xf32>
    %135 = arith.mulf %124, %73 : vector<16x32xf32>
    %136 = arith.addf %134, %135 : vector<16x32xf32>
    %137 = arith.mulf %122, %71 : vector<16x32xf32>
    %138 = arith.addf %65, %137 : vector<16x32xf32>
    %139 = arith.mulf %123, %68 : vector<16x32xf32>
    %140 = arith.addf %138, %139 : vector<16x32xf32>
    %141 = arith.mulf %124, %74 : vector<16x32xf32>
    %142 = arith.addf %140, %141 : vector<16x32xf32>
    %143 = vector.extract_strided_slice %121 {offsets = [0, 96], sizes = [16, 32], strides = [1, 1]} : vector<16x512xf32> to vector<16x32xf32>
    %144 = arith.mulf %143, %4 : vector<16x32xf32>
    %145 = arith.addf %3, %144 : vector<16x32xf32>
    %146 = vector.extract_strided_slice %121 {offsets = [0, 128], sizes = [16, 32], strides = [1, 1]} : vector<16x512xf32> to vector<16x32xf32>
    %147 = arith.mulf %146, %17 : vector<16x32xf32>
    %148 = arith.addf %145, %147 : vector<16x32xf32>
    %149 = vector.extract_strided_slice %121 {offsets = [0, 160], sizes = [16, 32], strides = [1, 1]} : vector<16x512xf32> to vector<16x32xf32>
    %150 = arith.mulf %149, %24 : vector<16x32xf32>
    %151 = arith.addf %148, %150 : vector<16x32xf32>
    %152 = vector.extract_strided_slice %121 {offsets = [0, 192], sizes = [16, 32], strides = [1, 1]} : vector<16x512xf32> to vector<16x32xf32>
    %153 = arith.mulf %152, %31 : vector<16x32xf32>
    %154 = arith.addf %151, %153 : vector<16x32xf32>
    %155 = vector.extract_strided_slice %121 {offsets = [0, 224], sizes = [16, 32], strides = [1, 1]} : vector<16x512xf32> to vector<16x32xf32>
    %156 = arith.mulf %155, %38 : vector<16x32xf32>
    %157 = arith.addf %154, %156 : vector<16x32xf32>
    %158 = vector.extract_strided_slice %121 {offsets = [0, 256], sizes = [16, 32], strides = [1, 1]} : vector<16x512xf32> to vector<16x32xf32>
    %159 = arith.mulf %158, %88 : vector<16x32xf32>
    %160 = arith.addf %157, %159 : vector<16x32xf32>
    %161 = vector.extract_strided_slice %121 {offsets = [0, 320], sizes = [16, 32], strides = [1, 1]} : vector<16x512xf32> to vector<16x32xf32>
    %162 = arith.mulf %161, %102 : vector<16x32xf32>
    %163 = arith.addf %160, %162 : vector<16x32xf32>
    %164 = vector.extract_strided_slice %121 {offsets = [0, 384], sizes = [16, 32], strides = [1, 1]} : vector<16x512xf32> to vector<16x32xf32>
    %165 = arith.mulf %164, %44 : vector<16x32xf32>
    %166 = arith.addf %163, %165 : vector<16x32xf32>
    %167 = vector.extract_strided_slice %121 {offsets = [0, 416], sizes = [16, 32], strides = [1, 1]} : vector<16x512xf32> to vector<16x32xf32>
    %168 = arith.mulf %167, %50 : vector<16x32xf32>
    %169 = arith.addf %166, %168 : vector<16x32xf32>
    %170 = vector.extract_strided_slice %121 {offsets = [0, 448], sizes = [16, 32], strides = [1, 1]} : vector<16x512xf32> to vector<16x32xf32>
    %171 = arith.mulf %170, %56 : vector<16x32xf32>
    %172 = arith.addf %169, %171 : vector<16x32xf32>
    %173 = vector.extract_strided_slice %121 {offsets = [0, 480], sizes = [16, 32], strides = [1, 1]} : vector<16x512xf32> to vector<16x32xf32>
    %174 = arith.mulf %173, %62 : vector<16x32xf32>
    %175 = arith.addf %172, %174 : vector<16x32xf32>
    %176 = tpu.concatenate %175, %130, %136, %142 in 1 : vector<16x32xf32>, vector<16x32xf32>, vector<16x32xf32>, vector<16x32xf32> -> vector<16x128xf32>
    %c0_14 = arith.constant 0 : index
    %c0_15 = arith.constant 0 : index
    %177 = vector.load %arg7[%c0_14, %c0_15] : memref<16x128xf32, #tpu.memory_space<vmem>>, vector<16x128xf32>
    tpu.vector_store %arg7[%c0_14, %c0_15], %176 {strides = array<i32>} : memref<16x128xf32, #tpu.memory_space<vmem>>, vector<16x128xf32>,
    return
  }
  func.func @transform_0(%arg0: i32) -> (i32, i32) {
    %c0_i32 = arith.constant 0 : i32
    %c0_i32_0 = arith.constant 0 : i32
    return %arg0, %c0_i32 : i32, i32
  }
  func.func @transform_1(%arg0: i32) -> (i32, i32) {
    %c0_i32 = arith.constant 0 : i32
    %c0_i32_0 = arith.constant 0 : i32
    %c0_i32_1 = arith.constant 0 : i32
    return %c0_i32, %c0_i32_0 : i32, i32
  }
  func.func @transform_2(%arg0: i32) -> (i32, i32) {
    %c0_i32 = arith.constant 0 : i32
    %c0_i32_0 = arith.constant 0 : i32
    %c0_i32_1 = arith.constant 0 : i32
    return %c0_i32, %c0_i32_0 : i32, i32
  }
  func.func @transform_3(%arg0: i32) -> (i32, i32) {
    %c0_i32 = arith.constant 0 : i32
    %c0_i32_0 = arith.constant 0 : i32
    %c0_i32_1 = arith.constant 0 : i32
    return %c0_i32, %c0_i32_0 : i32, i32
  }
  func.func @transform_4(%arg0: i32) -> (i32, i32) {
    %c0_i32 = arith.constant 0 : i32
    %c0_i32_0 = arith.constant 0 : i32
    %c0_i32_1 = arith.constant 0 : i32
    return %c0_i32, %c0_i32_0 : i32, i32
  }
  func.func @transform_5(%arg0: i32) -> (i32, i32) {
    %c0_i32 = arith.constant 0 : i32
    %c0_i32_0 = arith.constant 0 : i32
    %c0_i32_1 = arith.constant 0 : i32
    return %c0_i32, %c0_i32_0 : i32, i32
  }
  func.func @transform_6(%arg0: i32) -> (i32, i32) {
    %c0_i32 = arith.constant 0 : i32
    %c0_i32_0 = arith.constant 0 : i32
    return %arg0, %c0_i32 : i32, i32
  }
}

</mosaic_0001>

<llo_original>
// kernel: deepdf_update_extended.1
$region0: #{deepdf_update_extended.1}
  #allocation0 [shape = 'u32[]', space=smem, size = 0x4, offset = 0x4, fixed_abs, tag = 'smem constant byte address 0x4 - core index']
  #allocation1 [shape = 'u32[72,128]{1,0:T(1,128)}', space=vmem, size = 0x9000, scoped, tag = 'internal scratch']
  %s0 = inlined_call_operand.vmem [shape: f32[16,256], index: 0, kind: input, shape index: {}]
  %s1 = inlined_call_operand.vmem [shape: bf16[192,192], index: 1, kind: input, shape index: {}]
  %s2 = inlined_call_operand.vmem [shape: bf16[384,256], index: 2, kind: input, shape index: {}]
  %s3 = inlined_call_operand.vmem [shape: f32[1,256], index: 3, kind: input, shape index: {}]
  %s4 = inlined_call_operand.vmem [shape: bf16[256,512], index: 4, kind: input, shape index: {}]
  %s5 = inlined_call_operand.vmem [shape: f32[1,512], index: 5, kind: input, shape index: {}]
  %s6 = inlined_call_operand.vmem [shape: f32[16,128], index: 6, kind: output, shape index: {}]
  %s7 = sld [smem:[#allocation0]]
  $region34: #{deepdf_update_extended.1} parent=0
    _
  %s9 = ssub.s32 1, %s7
  %s10 = scalar_select 0, %s9, %s7
  // Predicated region
  $region2: #{deepdf_update_extended.1} parent=0 // pred_check
    _
  $region3: #{deepdf_update_extended.1} parent=0 // pred_check_branch
    %12 = sbr.rel (0) target = $region5
  $region4: #{deepdf_update_extended.1} parent=0 // pred_region
    _
  $region5: #{deepdf_update_extended.1} parent=0 // pred_fallthru
    _
  // Predicated region
  $region6: #{deepdf_update_extended.1} parent=0 // pred_check
    _
  $region7: #{deepdf_update_extended.1} parent=0 // pred_check_branch
    %14 = sbr.rel (0) target = $region9
  $region8: #{deepdf_update_extended.1} parent=0 // pred_region
    _
  $region9: #{deepdf_update_extended.1} parent=0 // pred_fallthru
    _
  // Predicated region
  $region10: #{deepdf_update_extended.1} parent=0 // pred_check
    _
  $region11: #{deepdf_update_extended.1} parent=0 // pred_check_branch
    %16 = sbr.rel (0) target = $region13
  $region12: #{deepdf_update_extended.1} parent=0 // pred_region
    _
  $region13: #{deepdf_update_extended.1} parent=0 // pred_fallthru
    _
  // Predicated region
  $region14: #{deepdf_update_extended.1} parent=0 // pred_check
    _
  $region15: #{deepdf_update_extended.1} parent=0 // pred_check_branch
    %18 = sbr.rel (0) target = $region17
  $region16: #{deepdf_update_extended.1} parent=0 // pred_region
    _
  $region17: #{deepdf_update_extended.1} parent=0 // pred_fallthru
    _
  // Predicated region
  $region18: #{deepdf_update_extended.1} parent=0 // pred_check
    _
  $region19: #{deepdf_update_extended.1} parent=0 // pred_check_branch
    %20 = sbr.rel (0) target = $region21
  $region20: #{deepdf_update_extended.1} parent=0 // pred_region
    _
  $region21: #{deepdf_update_extended.1} parent=0 // pred_fallthru
    _
  // Predicated region
  $region22: #{deepdf_update_extended.1} parent=0 // pred_check
    _
  $region23: #{deepdf_update_extended.1} parent=0 // pred_check_branch
    %22 = sbr.rel (0) target = $region25
  $region24: #{deepdf_update_extended.1} parent=0 // pred_region
    _
  $region25: #{deepdf_update_extended.1} parent=0 // pred_fallthru
    _
  %v24 = vld [vmem:[%s0] sm:$0xff]
  %v25 = vld [vmem:[%s0 + $0x8] sm:$0xff]
  %v26 = vld [vmem:[%s0 + $0x10] sm:$0xff]
  %v27 = vld [vmem:[%s0 + $0x18] sm:$0xff]
  %v28 = vpack.c.bf16 %v26, %v24
  %v29 = vpack.c.bf16 %v27, %v25
  %v30 = vld [vmem:[%s1] sm:$0xff]
  %v31 = vld [vmem:[%s1 + $0x8] sm:$0xff]
  %v32 = vld [vmem:[%s1 + $0x10] sm:$0xff]
  %v33 = vld [vmem:[%s1 + $0x18] sm:$0xff]
  %v34 = vld [vmem:[%s1 + $0x20] sm:$0xff]
  %v35 = vld [vmem:[%s1 + $0x28] sm:$0xff]
  %v36 = vld [vmem:[%s1 + $0x30] sm:$0xff]
  %v37 = vld [vmem:[%s1 + $0x38] sm:$0xff]
  %v38 = vld [vmem:[%s1 + $0x40] sm:$0xff]
  %v39 = vld [vmem:[%s1 + $0x48] sm:$0xff]
  %v40 = vld [vmem:[%s1 + $0x50] sm:$0xff]
  %v41 = vld [vmem:[%s1 + $0x58] sm:$0xff]
  %v42 = vld [vmem:[%s1 + $0x60] sm:$0xff]
  %v43 = vld [vmem:[%s1 + $0x68] sm:$0xff]
  %v44 = vld [vmem:[%s1 + $0x70] sm:$0xff]
  %v45 = vld [vmem:[%s1 + $0x78] sm:$0xff]
  %v46 = vld [vmem:[%s1 + $0x80] sm:$0xff]
  %v47 = vld [vmem:[%s1 + $0x88] sm:$0xff]
  %v48 = vld [vmem:[%s1 + $0x90] sm:$0xff]
  %v49 = vld [vmem:[%s1 + $0x98] sm:$0xff]
  %v50 = vld [vmem:[%s1 + $0xa0] sm:$0xff]
  %v51 = vld [vmem:[%s1 + $0xa8] sm:$0xff]
  %v52 = vld [vmem:[%s1 + $0xb0] sm:$0xff]
  %v53 = vld [vmem:[%s1 + $0xb8] sm:$0xff]
  %v78 = vunpack.c.l.b16 %v30
  %v79 = vunpack.c.h.b16 %v30
  %v80 = vunpack.c.l.b16 %v31
  %v81 = vunpack.c.h.b16 %v31
  %v82 = vunpack.c.l.b16 %v32
  %v83 = vunpack.c.h.b16 %v32
  %v84 = vunpack.c.l.b16 %v33
  %v85 = vunpack.c.h.b16 %v33
  %v86 = vunpack.c.l.b16 %v34
  %v87 = vunpack.c.h.b16 %v34
  %v88 = vunpack.c.l.b16 %v35
  %v89 = vunpack.c.h.b16 %v35
  %v90 = vunpack.c.l.b16 %v36
  %v91 = vunpack.c.h.b16 %v36
  %v92 = vunpack.c.l.b16 %v37
  %v93 = vunpack.c.h.b16 %v37
  %v94 = vunpack.c.l.b16 %v38
  %v95 = vunpack.c.h.b16 %v38
  %v96 = vunpack.c.l.b16 %v39
  %v97 = vunpack.c.h.b16 %v39
  %v98 = vunpack.c.l.b16 %v40
  %v99 = vunpack.c.h.b16 %v40
  %v100 = vunpack.c.l.b16 %v41
  %v101 = vunpack.c.h.b16 %v41
  %v102 = vunpack.c.l.b16 %v42
  %v103 = vunpack.c.h.b16 %v42
  %v104 = vunpack.c.l.b16 %v43
  %v105 = vunpack.c.h.b16 %v43
  %v106 = vunpack.c.l.b16 %v44
  %v107 = vunpack.c.h.b16 %v44
  %v108 = vunpack.c.l.b16 %v45
  %v109 = vunpack.c.h.b16 %v45
  %v110 = vunpack.c.l.b16 %v46
  %v111 = vunpack.c.h.b16 %v46
  %v112 = vunpack.c.l.b16 %v47
  %v113 = vunpack.c.h.b16 %v47
  %v114 = vunpack.c.l.b16 %v48
  %v115 = vunpack.c.h.b16 %v48
  %v116 = vunpack.c.l.b16 %v49
  %v117 = vunpack.c.h.b16 %v49
  %v118 = vunpack.c.l.b16 %v50
  %v119 = vunpack.c.h.b16 %v50
  %v120 = vunpack.c.l.b16 %v51
  %v121 = vunpack.c.h.b16 %v51
  %v122 = vunpack.c.l.b16 %v52
  %v123 = vunpack.c.h.b16 %v52
  %v124 = vunpack.c.l.b16 %v53
  %v125 = vunpack.c.h.b16 %v53
  %v126 = vpack.c.b16 %v80, %v78
  %v127 = vpack.c.b16 %v81, %v79
  %v128 = vpack.c.b16 %v84, %v82
  %v129 = vpack.c.b16 %v85, %v83
  %v130 = vpack.c.b16 %v88, %v86
  %v131 = vpack.c.b16 %v89, %v87
  %v132 = vpack.c.b16 %v92, %v90
  %v133 = vpack.c.b16 %v93, %v91
  %v134 = vpack.c.b16 %v96, %v94
  %v135 = vpack.c.b16 %v97, %v95
  %v136 = vpack.c.b16 %v100, %v98
  %v137 = vpack.c.b16 %v101, %v99
  %v138 = vpack.c.b16 %v104, %v102
  %v139 = vpack.c.b16 %v105, %v103
  %v140 = vpack.c.b16 %v108, %v106
  %v141 = vpack.c.b16 %v109, %v107
  %v142 = vpack.c.b16 %v112, %v110
  %v143 = vpack.c.b16 %v113, %v111
  %v144 = vpack.c.b16 %v116, %v114
  %v145 = vpack.c.b16 %v117, %v115
  %v146 = vpack.c.b16 %v120, %v118
  %v147 = vpack.c.b16 %v121, %v119
  %v148 = vpack.c.b16 %v124, %v122
  %v149 = vpack.c.b16 %v125, %v123
  %vm174 = vcmask 523264
  %v176 = vsel %vm174, %v29, 0
  %178 = vmatpush.bf16.msra.mxu0 %v140
  %179 = vmatpush.bf16.msra.mxu0 %v138
  %180 = vmatpush.bf16.msra.mxu0 %v136
  %181 = vmatpush.bf16.msra.mxu0 %v134
  %182 = vmatpush.bf16.msra.mxu0 %v132
  %183 = vmatpush.bf16.msra.mxu0 %v130
  %184 = vmatpush.bf16.msra.mxu0 %v128
  %185 = vmatpush.bf16.msra.mxu0 %v126
  %186 = vmatmul.bf16.gmra.mxu0 %v28
  %v187 = vpop.f32.mrf.mxu0
  %v188 = vadd.f32 0.0, %v187
  %v189 = vpop.f32.mrf.mxu0
  %v190 = vadd.f32 0.0, %v189
  %191 = vdwg.mxu0
  %192 = vmatpush.bf16.msra.mxu0 0
  %193 = vmatpush.bf16.msra.mxu0 0
  %194 = vmatpush.bf16.msra.mxu0 0
  %195 = vmatpush.bf16.msra.mxu0 0
  %196 = vmatpush.bf16.msra.mxu0 %v148
  %197 = vmatpush.bf16.msra.mxu0 %v146
  %198 = vmatpush.bf16.msra.mxu0 %v144
  %199 = vmatpush.bf16.msra.mxu0 %v142
  %200 = vmatmul.bf16.gmra.mxu0 %v176
  %v201 = vpop.f32.mrf.mxu0
  %v202 = vadd.f32 %v188, %v201
  %v203 = vpop.f32.mrf.mxu0
  %v204 = vadd.f32 %v190, %v203
  %205 = vdwg.mxu0
  %206 = vmatpush.bf16.msra.mxu0 %v141
  %207 = vmatpush.bf16.msra.mxu0 %v139
  %208 = vmatpush.bf16.msra.mxu0 %v137
  %209 = vmatpush.bf16.msra.mxu0 %v135
  %210 = vmatpush.bf16.msra.mxu0 %v133
  %211 = vmatpush.bf16.msra.mxu0 %v131
  %212 = vmatpush.bf16.msra.mxu0 %v129
  %213 = vmatpush.bf16.msra.mxu0 %v127
  %214 = vmatmul.bf16.gmra.mxu0 %v28
  %v215 = vpop.f32.mrf.mxu0
  %v216 = vadd.f32 0.0, %v215
  %v217 = vpop.f32.mrf.mxu0
  %v218 = vadd.f32 0.0, %v217
  %219 = vdwg.mxu0
  %220 = vmatpush.bf16.msra.mxu0 0
  %221 = vmatpush.bf16.msra.mxu0 0
  %222 = vmatpush.bf16.msra.mxu0 0
  %223 = vmatpush.bf16.msra.mxu0 0
  %224 = vmatpush.bf16.msra.mxu0 %v149
  %225 = vmatpush.bf16.msra.mxu0 %v147
  %226 = vmatpush.bf16.msra.mxu0 %v145
  %227 = vmatpush.bf16.msra.mxu0 %v143
  %228 = vmatmul.bf16.gmra.mxu0 %v176
  %v229 = vpop.f32.mrf.mxu0
  %v230 = vadd.f32 %v216, %v229
  %v231 = vpop.f32.mrf.mxu0
  %v232 = vadd.f32 %v218, %v231
  %233 = vdwg.mxu0
  %v234 = vmul.f32 %v24, %v24
  %v235 = vmul.f32 %v26, %v26
  %238 = vrot.lane.b32.xlu0 %v234, 96
  %v239 = vpop.permute.xlu0 %238
  %240 = vrot.lane.b32.xlu0 %v235, 96
  %v241 = vpop.permute.xlu0 %240
  %v244 = vadd.f32 %v234, %v239
  %v245 = vadd.f32 %v235, %v241
  %246 = vrot.lane.b32.xlu0 %v234, 64
  %v247 = vpop.permute.xlu0 %246
  %248 = vrot.lane.b32.xlu0 %v235, 64
  %v249 = vpop.permute.xlu0 %248
  %v252 = vadd.f32 %v244, %v247
  %v253 = vadd.f32 %v245, %v249
  %v254 = vrsqrt.pop %v252
  %v255 = vmul.f32 %v254, %v252
  %v256 = vmul.f32 %v255, %v254
  %v257 = vmul.f32 0.5, %v256
  %v258 = vsub.f32 1.5, %v257
  %v259 = vmul.f32 %v254, %v258
  %v260 = vmul.f32 %v252, %v259
  %vm261 = vcmp.eq.f32.partialorder %v252, inf
  %v262 = vsel %vm261, %v252, %v260
  %vm263 = vcmp.eq.f32.partialorder %v252, 0.0
  %v264 = vand.u32 %v252, 2147483648
  %v265 = vsel %vm263, %v264, %v262
  %v266 = vrsqrt.pop %v253
  %v267 = vmul.f32 %v266, %v253
  %v268 = vmul.f32 %v267, %v266
  %v269 = vmul.f32 0.5, %v268
  %v270 = vsub.f32 1.5, %v269
  %v271 = vmul.f32 %v266, %v270
  %v272 = vmul.f32 %v253, %v271
  %vm273 = vcmp.eq.f32.partialorder %v253, inf
  %v274 = vsel %vm273, %v253, %v272
  %vm275 = vcmp.eq.f32.partialorder %v253, 0.0
  %v276 = vand.u32 %v253, 2147483648
  %v277 = vsel %vm275, %v276, %v274
  %v278 = vmul.f32 %v25, %v25
  %v279 = vmul.f32 %v27, %v27
  %282 = vrot.lane.b32.xlu0 %v278, 96
  %v283 = vpop.permute.xlu0 %282
  %284 = vrot.lane.b32.xlu0 %v279, 96
  %v285 = vpop.permute.xlu0 %284
  %v288 = vadd.f32 %v234, %v283
  %v289 = vadd.f32 %v235, %v285
  %290 = vrot.lane.b32.xlu0 %v278, 64
  %v291 = vpop.permute.xlu0 %290
  %292 = vrot.lane.b32.xlu0 %v279, 64
  %v293 = vpop.permute.xlu0 %292
  %v296 = vadd.f32 %v288, %v291
  %v297 = vadd.f32 %v289, %v293
  %v298 = vrsqrt.pop %v296
  %v299 = vmul.f32 %v298, %v296
  %v300 = vmul.f32 %v299, %v298
  %v301 = vmul.f32 0.5, %v300
  %v302 = vsub.f32 1.5, %v301
  %v303 = vmul.f32 %v298, %v302
  %v304 = vmul.f32 %v296, %v303
  %vm305 = vcmp.eq.f32.partialorder %v296, inf
  %v306 = vsel %vm305, %v296, %v304
  %vm307 = vcmp.eq.f32.partialorder %v296, 0.0
  %v308 = vand.u32 %v296, 2147483648
  %v309 = vsel %vm307, %v308, %v306
  %v310 = vrsqrt.pop %v297
  %v311 = vmul.f32 %v310, %v297
  %v312 = vmul.f32 %v311, %v310
  %v313 = vmul.f32 0.5, %v312
  %v314 = vsub.f32 1.5, %v313
  %v315 = vmul.f32 %v310, %v314
  %v316 = vmul.f32 %v297, %v315
  %vm317 = vcmp.eq.f32.partialorder %v297, inf
  %v318 = vsel %vm317, %v297, %v316
  %vm319 = vcmp.eq.f32.partialorder %v297, 0.0
  %v320 = vand.u32 %v297, 2147483648
  %v321 = vsel %vm319, %v320, %v318
  %v322 = vmul.f32 %v202, %v202
  %v323 = vmul.f32 %v204, %v204
  %326 = vrot.lane.b32.xlu0 %v322, 96
  %v327 = vpop.permute.xlu0 %326
  %328 = vrot.lane.b32.xlu0 %v323, 96
  %v329 = vpop.permute.xlu0 %328
  %v332 = vadd.f32 %v322, %v327
  %v333 = vadd.f32 %v323, %v329
  %334 = vrot.lane.b32.xlu0 %v322, 64
  %v335 = vpop.permute.xlu0 %334
  %336 = vrot.lane.b32.xlu0 %v323, 64
  %v337 = vpop.permute.xlu0 %336
  %v340 = vadd.f32 %v332, %v335
  %v341 = vadd.f32 %v333, %v337
  %v342 = vrsqrt.pop %v340
  %v343 = vmul.f32 %v342, %v340
  %v344 = vmul.f32 %v343, %v342
  %v345 = vmul.f32 0.5, %v344
  %v346 = vsub.f32 1.5, %v345
  %v347 = vmul.f32 %v342, %v346
  %v348 = vmul.f32 %v340, %v347
  %vm349 = vcmp.eq.f32.partialorder %v340, inf
  %v350 = vsel %vm349, %v340, %v348
  %vm351 = vcmp.eq.f32.partialorder %v340, 0.0
  %v352 = vand.u32 %v340, 2147483648
  %v353 = vsel %vm351, %v352, %v350
  %v354 = vrsqrt.pop %v341
  %v355 = vmul.f32 %v354, %v341
  %v356 = vmul.f32 %v355, %v354
  %v357 = vmul.f32 0.5, %v356
  %v358 = vsub.f32 1.5, %v357
  %v359 = vmul.f32 %v354, %v358
  %v360 = vmul.f32 %v341, %v359
  %vm361 = vcmp.eq.f32.partialorder %v341, inf
  %v362 = vsel %vm361, %v341, %v360
  %vm363 = vcmp.eq.f32.partialorder %v341, 0.0
  %v364 = vand.u32 %v341, 2147483648
  %v365 = vsel %vm363, %v364, %v362
  %v366 = vmul.f32 %v230, %v230
  %v367 = vmul.f32 %v232, %v232
  %370 = vrot.lane.b32.xlu0 %v366, 96
  %v371 = vpop.permute.xlu0 %370
  %372 = vrot.lane.b32.xlu0 %v367, 96
  %v373 = vpop.permute.xlu0 %372
  %v376 = vadd.f32 %v322, %v371
  %v377 = vadd.f32 %v323, %v373
  %378 = vrot.lane.b32.xlu0 %v366, 64
  %v379 = vpop.permute.xlu0 %378
  %380 = vrot.lane.b32.xlu0 %v367, 64
  %v381 = vpop.permute.xlu0 %380
  %v384 = vadd.f32 %v376, %v379
  %v385 = vadd.f32 %v377, %v381
  %v386 = vrsqrt.pop %v384
  %v387 = vmul.f32 %v386, %v384
  %v388 = vmul.f32 %v387, %v386
  %v389 = vmul.f32 0.5, %v388
  %v390 = vsub.f32 1.5, %v389
  %v391 = vmul.f32 %v386, %v390
  %v392 = vmul.f32 %v384, %v391
  %vm393 = vcmp.eq.f32.partialorder %v384, inf
  %v394 = vsel %vm393, %v384, %v392
  %vm395 = vcmp.eq.f32.partialorder %v384, 0.0
  %v396 = vand.u32 %v384, 2147483648
  %v397 = vsel %vm395, %v396, %v394
  %v398 = vrsqrt.pop %v385
  %v399 = vmul.f32 %v398, %v385
  %v400 = vmul.f32 %v399, %v398
  %v401 = vmul.f32 0.5, %v400
  %v402 = vsub.f32 1.5, %v401
  %v403 = vmul.f32 %v398, %v402
  %v404 = vmul.f32 %v385, %v403
  %vm405 = vcmp.eq.f32.partialorder %v385, inf
  %v406 = vsel %vm405, %v385, %v404
  %vm407 = vcmp.eq.f32.partialorder %v385, 0.0
  %v408 = vand.u32 %v385, 2147483648
  %v409 = vsel %vm407, %v408, %v406
  %414 = vrot.lane.b32.xlu0 %v24, 32
  %v415 = vpop.permute.xlu0 %414
  %416 = vrot.lane.b32.xlu0 %v25, 32
  %v417 = vpop.permute.xlu0 %416
  %418 = vrot.lane.b32.xlu0 %v26, 32
  %v419 = vpop.permute.xlu0 %418
  %420 = vrot.lane.b32.xlu0 %v27, 32
  %v421 = vpop.permute.xlu0 %420
  %vm422 = vcmask 261120
  %v423 = vsel %vm422, %v415, %v417
  %v424 = vsel %vm422, %v419, %v421
  %v427 = vmul.f32 %v24, %v423
  %v428 = vmul.f32 %v26, %v424
  %431 = vrot.lane.b32.xlu0 %v427, 96
  %v432 = vpop.permute.xlu0 %431
  %433 = vrot.lane.b32.xlu0 %v428, 96
  %v434 = vpop.permute.xlu0 %433
  %v437 = vadd.f32 %v427, %v432
  %v438 = vadd.f32 %v428, %v434
  %439 = vrot.lane.b32.xlu0 %v427, 64
  %v440 = vpop.permute.xlu0 %439
  %441 = vrot.lane.b32.xlu0 %v428, 64
  %v442 = vpop.permute.xlu0 %441
  %v445 = vadd.f32 %v437, %v440
  %v446 = vadd.f32 %v438, %v442
  %451 = vrot.lane.b32.xlu0 %v202, 32
  %v452 = vpop.permute.xlu0 %451
  %453 = vrot.lane.b32.xlu0 %v230, 32
  %v454 = vpop.permute.xlu0 %453
  %455 = vrot.lane.b32.xlu0 %v204, 32
  %v456 = vpop.permute.xlu0 %455
  %457 = vrot.lane.b32.xlu0 %v232, 32
  %v458 = vpop.permute.xlu0 %457
  %v459 = vsel %vm422, %v452, %v454
  %v460 = vsel %vm422, %v456, %v458
  %v463 = vmul.f32 %v24, %v459
  %v464 = vmul.f32 %v26, %v460
  %467 = vrot.lane.b32.xlu0 %v463, 96
  %v468 = vpop.permute.xlu0 %467
  %469 = vrot.lane.b32.xlu0 %v464, 96
  %v470 = vpop.permute.xlu0 %469
  %v473 = vadd.f32 %v463, %v468
  %v474 = vadd.f32 %v464, %v470
  %475 = vrot.lane.b32.xlu0 %v463, 64
  %v476 = vpop.permute.xlu0 %475
  %477 = vrot.lane.b32.xlu0 %v464, 64
  %v478 = vpop.permute.xlu0 %477
  %v481 = vadd.f32 %v473, %v476
  %v482 = vadd.f32 %v474, %v478
  %v483 = vmul.f32 %v202, %v423
  %v484 = vmul.f32 %v204, %v424
  %487 = vrot.lane.b32.xlu0 %v483, 96
  %v488 = vpop.permute.xlu0 %487
  %489 = vrot.lane.b32.xlu0 %v484, 96
  %v490 = vpop.permute.xlu0 %489
  %v493 = vadd.f32 %v483, %v488
  %v494 = vadd.f32 %v484, %v490
  %495 = vrot.lane.b32.xlu0 %v483, 64
  %v496 = vpop.permute.xlu0 %495
  %497 = vrot.lane.b32.xlu0 %v484, 64
  %v498 = vpop.permute.xlu0 %497
  %v501 = vadd.f32 %v493, %v496
  %v502 = vadd.f32 %v494, %v498
  %v503 = vmul.f32 %v202, %v459
  %v504 = vmul.f32 %v204, %v460
  %507 = vrot.lane.b32.xlu0 %v503, 96
  %v508 = vpop.permute.xlu0 %507
  %509 = vrot.lane.b32.xlu0 %v504, 96
  %v510 = vpop.permute.xlu0 %509
  %v513 = vadd.f32 %v503, %v508
  %v514 = vadd.f32 %v504, %v510
  %515 = vrot.lane.b32.xlu0 %v503, 64
  %v516 = vpop.permute.xlu0 %515
  %517 = vrot.lane.b32.xlu0 %v504, 64
  %v518 = vpop.permute.xlu0 %517
  %v521 = vadd.f32 %v513, %v516
  %v522 = vadd.f32 %v514, %v518
  %v523 = vmul.f32 %v24, %v25
  %v524 = vmul.f32 %v26, %v27
  %525 = vrot.lane.b32.xlu0 %v25, 64
  %v526 = vpop.permute.xlu0 %525
  %527 = vrot.lane.b32.xlu0 %v27, 64
  %v528 = vpop.permute.xlu0 %527
  %v531 = vmul.f32 %v24, %v526
  %v532 = vmul.f32 %v26, %v528
  %535 = vrot.lane.b32.xlu0 %v531, 96
  %v536 = vpop.permute.xlu0 %535
  %537 = vrot.lane.b32.xlu0 %v532, 96
  %v538 = vpop.permute.xlu0 %537
  %v541 = vsub.f32 %v523, %v536
  %v542 = vsub.f32 %v524, %v538
  %543 = vrot.lane.b32.xlu0 %v24, 96
  %v544 = vpop.permute.xlu0 %543
  %545 = vrot.lane.b32.xlu0 %v26, 96
  %v546 = vpop.permute.xlu0 %545
  %v549 = vmul.f32 %v24, %v544
  %v550 = vmul.f32 %v26, %v546
  %551 = vrot.lane.b32.xlu0 %v25, 96
  %v552 = vpop.permute.xlu0 %551
  %553 = vrot.lane.b32.xlu0 %v27, 96
  %v554 = vpop.permute.xlu0 %553
  %v557 = vmul.f32 %v24, %v552
  %v558 = vmul.f32 %v26, %v554
  %561 = vrot.lane.b32.xlu0 %v557, 64
  %v562 = vpop.permute.xlu0 %561
  %563 = vrot.lane.b32.xlu0 %v558, 64
  %v564 = vpop.permute.xlu0 %563
  %v567 = vsub.f32 %v549, %v562
  %v568 = vsub.f32 %v550, %v564
  %569 = vrot.lane.b32.xlu0 %v24, 64
  %v570 = vpop.permute.xlu0 %569
  %571 = vrot.lane.b32.xlu0 %v26, 64
  %v572 = vpop.permute.xlu0 %571
  %v575 = vmul.f32 %v24, %v570
  %v576 = vmul.f32 %v26, %v572
  %579 = vrot.lane.b32.xlu0 %v575, 96
  %v580 = vpop.permute.xlu0 %579
  %581 = vrot.lane.b32.xlu0 %v576, 96
  %v582 = vpop.permute.xlu0 %581
  %v585 = vsub.f32 %v523, %v580
  %v586 = vsub.f32 %v524, %v582
  %v587 = vmul.f32 %v541, %v541
  %v588 = vmul.f32 %v542, %v542
  %v589 = vmul.f32 %v567, %v567
  %v590 = vmul.f32 %v568, %v568
  %593 = vrot.lane.b32.xlu0 %v589, 96
  %v594 = vpop.permute.xlu0 %593
  %595 = vrot.lane.b32.xlu0 %v590, 96
  %v596 = vpop.permute.xlu0 %595
  %v599 = vadd.f32 %v587, %v594
  %v600 = vadd.f32 %v588, %v596
  %v601 = vmul.f32 %v585, %v585
  %v602 = vmul.f32 %v586, %v586
  %605 = vrot.lane.b32.xlu0 %v601, 32
  %v606 = vpop.permute.xlu0 %605
  %607 = vrot.lane.b32.xlu0 %v602, 32
  %v608 = vpop.permute.xlu0 %607
  %v611 = vadd.f32 %v599, %v606
  %v612 = vadd.f32 %v600, %v608
  %v613 = vmul.f32 %v202, %v25
  %v614 = vmul.f32 %v204, %v27
  %v615 = vmul.f32 %v202, %v526
  %v616 = vmul.f32 %v204, %v528
  %619 = vrot.lane.b32.xlu0 %v615, 96
  %v620 = vpop.permute.xlu0 %619
  %621 = vrot.lane.b32.xlu0 %v616, 96
  %v622 = vpop.permute.xlu0 %621
  %v625 = vsub.f32 %v613, %v620
  %v626 = vsub.f32 %v614, %v622
  %v627 = vmul.f32 %v202, %v544
  %v628 = vmul.f32 %v204, %v546
  %v629 = vmul.f32 %v202, %v552
  %v630 = vmul.f32 %v204, %v554
  %633 = vrot.lane.b32.xlu0 %v629, 64
  %v634 = vpop.permute.xlu0 %633
  %635 = vrot.lane.b32.xlu0 %v630, 64
  %v636 = vpop.permute.xlu0 %635
  %v639 = vsub.f32 %v627, %v634
  %v640 = vsub.f32 %v628, %v636
  %v641 = vmul.f32 %v202, %v570
  %v642 = vmul.f32 %v204, %v572
  %645 = vrot.lane.b32.xlu0 %v641, 96
  %v646 = vpop.permute.xlu0 %645
  %647 = vrot.lane.b32.xlu0 %v642, 96
  %v648 = vpop.permute.xlu0 %647
  %v651 = vsub.f32 %v613, %v646
  %v652 = vsub.f32 %v614, %v648
  %v653 = vmul.f32 %v625, %v625
  %v654 = vmul.f32 %v626, %v626
  %v655 = vmul.f32 %v639, %v639
  %v656 = vmul.f32 %v640, %v640
  %659 = vrot.lane.b32.xlu0 %v655, 96
  %v660 = vpop.permute.xlu0 %659
  %661 = vrot.lane.b32.xlu0 %v656, 96
  %v662 = vpop.permute.xlu0 %661
  %v665 = vadd.f32 %v653, %v660
  %v666 = vadd.f32 %v654, %v662
  %v667 = vmul.f32 %v651, %v651
  %v668 = vmul.f32 %v652, %v652
  %671 = vrot.lane.b32.xlu0 %v667, 32
  %v672 = vpop.permute.xlu0 %671
  %673 = vrot.lane.b32.xlu0 %v668, 32
  %v674 = vpop.permute.xlu0 %673
  %v677 = vadd.f32 %v665, %v672
  %v678 = vadd.f32 %v666, %v674
  %681 = vrot.lane.b32.xlu0 %v309, 64
  %v682 = vpop.permute.xlu0 %681
  %683 = vrot.lane.b32.xlu0 %v321, 64
  %v684 = vpop.permute.xlu0 %683
  %689 = vrot.lane.b32.xlu0 %v353, 64
  %v690 = vpop.permute.xlu0 %689
  %691 = vrot.lane.b32.xlu0 %v365, 64
  %v692 = vpop.permute.xlu0 %691
  %697 = vrot.lane.b32.xlu0 %v611, 96
  %v698 = vpop.permute.xlu0 %697
  %699 = vrot.lane.b32.xlu0 %v612, 96
  %v700 = vpop.permute.xlu0 %699
  %705 = vrot.lane.b32.xlu0 %v445, 64
  %v706 = vpop.permute.xlu0 %705
  %707 = vrot.lane.b32.xlu0 %v446, 64
  %v708 = vpop.permute.xlu0 %707
  %713 = vrot.lane.b32.xlu0 %v481, 96
  %v714 = vpop.permute.xlu0 %713
  %715 = vrot.lane.b32.xlu0 %v482, 96
  %v716 = vpop.permute.xlu0 %715
  %721 = vrot.lane.b32.xlu0 %v521, 32
  %v722 = vpop.permute.xlu0 %721
  %723 = vrot.lane.b32.xlu0 %v522, 32
  %v724 = vpop.permute.xlu0 %723
  %v727 = vsel %vm422, %v265, %v682
  %v728 = vsel %vm422, %v277, %v684
  %v729 = vsel %vm174, %v727, %v690
  %v730 = vsel %vm174, %v728, %v692
  %vm731 = vcmask 785408
  %v732 = vsel %vm731, %v729, %v397
  %v733 = vsel %vm731, %v730, %v409
  %v734 = vsel %vm422, %v698, %v677
  %v735 = vsel %vm422, %v700, %v678
  %v736 = vsel %vm174, %v734, %v706
  %v737 = vsel %vm174, %v735, %v708
  %v738 = vsel %vm731, %v736, %v714
  %v739 = vsel %vm731, %v737, %v716
  %v740 = vsel %vm422, %v501, %v722
  %v741 = vsel %vm422, %v502, %v724
  %v742 = vsel %vm174, %v740, %v25
  %v743 = vsel %vm174, %v741, %v27
  %v744 = vsel %vm731, %v742, %v25
  %v745 = vsel %vm731, %v743, %v27
  %v746 = vpack.c.bf16 %v733, %v732
  %v747 = vpack.c.bf16 %v739, %v738
  %v748 = vpack.c.bf16 %v745, %v744
  %v749 = vld [vmem:[%s2] sm:$0xff]
  %v750 = vld [vmem:[%s2 + $0x8] sm:$0xff]
  %v751 = vld [vmem:[%s2 + $0x10] sm:$0xff]
  %v752 = vld [vmem:[%s2 + $0x18] sm:$0xff]
  %v753 = vld [vmem:[%s2 + $0x20] sm:$0xff]
  %v754 = vld [vmem:[%s2 + $0x28] sm:$0xff]
  %v755 = vld [vmem:[%s2 + $0x30] sm:$0xff]
  %v756 = vld [vmem:[%s2 + $0x38] sm:$0xff]
  %v757 = vld [vmem:[%s2 + $0x40] sm:$0xff]
  %v758 = vld [vmem:[%s2 + $0x48] sm:$0xff]
  %v759 = vld [vmem:[%s2 + $0x50] sm:$0xff]
  %v760 = vld [vmem:[%s2 + $0x58] sm:$0xff]
  %v761 = vld [vmem:[%s2 + $0x60] sm:$0xff]
  %v762 = vld [vmem:[%s2 + $0x68] sm:$0xff]
  %v763 = vld [vmem:[%s2 + $0x70] sm:$0xff]
  %v764 = vld [vmem:[%s2 + $0x78] sm:$0xff]
  %v765 = vld [vmem:[%s2 + $0x80] sm:$0xff]
  %v766 = vld [vmem:[%s2 + $0x88] sm:$0xff]
  %v767 = vld [vmem:[%s2 + $0x90] sm:$0xff]
  %v768 = vld [vmem:[%s2 + $0x98] sm:$0xff]
  %v769 = vld [vmem:[%s2 + $0xa0] sm:$0xff]
  %v770 = vld [vmem:[%s2 + $0xa8] sm:$0xff]
  %v771 = vld [vmem:[%s2 + $0xb0] sm:$0xff]
  %v772 = vld [vmem:[%s2 + $0xb8] sm:$0xff]
  %v773 = vld [vmem:[%s2 + $0xc0] sm:$0xff]
  %v774 = vld [vmem:[%s2 + $0xc8] sm:$0xff]
  %v775 = vld [vmem:[%s2 + $0xd0] sm:$0xff]
  %v776 = vld [vmem:[%s2 + $0xd8] sm:$0xff]
  %v777 = vld [vmem:[%s2 + $0xe0] sm:$0xff]
  %v778 = vld [vmem:[%s2 + $0xe8] sm:$0xff]
  %v779 = vld [vmem:[%s2 + $0xf0] sm:$0xff]
  %v780 = vld [vmem:[%s2 + $0xf8] sm:$0xff]
  %v781 = vld [vmem:[%s2 + $0x100] sm:$0xff]
  %v782 = vld [vmem:[%s2 + $0x108] sm:$0xff]
  %v783 = vld [vmem:[%s2 + $0x110] sm:$0xff]
  %v784 = vld [vmem:[%s2 + $0x118] sm:$0xff]
  %v785 = vld [vmem:[%s2 + $0x120] sm:$0xff]
  %v786 = vld [vmem:[%s2 + $0x128] sm:$0xff]
  %v787 = vld [vmem:[%s2 + $0x130] sm:$0xff]
  %v788 = vld [vmem:[%s2 + $0x138] sm:$0xff]
  %v789 = vld [vmem:[%s2 + $0x140] sm:$0xff]
  %v790 = vld [vmem:[%s2 + $0x148] sm:$0xff]
  %v791 = vld [vmem:[%s2 + $0x150] sm:$0xff]
  %v792 = vld [vmem:[%s2 + $0x158] sm:$0xff]
  %v793 = vld [vmem:[%s2 + $0x160] sm:$0xff]
  %v794 = vld [vmem:[%s2 + $0x168] sm:$0xff]
  %v795 = vld [vmem:[%s2 + $0x170] sm:$0xff]
  %v796 = vld [vmem:[%s2 + $0x178] sm:$0xff]
  %v797 = vld [vmem:[%s3] sm:$0x3]
  %v799 = vperm.slane %v797, 0
  %v800 = vperm.slane %v797, 1
  %v851 = vunpack.c.l.b16 %v749
  %v852 = vunpack.c.h.b16 %v749
  %v853 = vunpack.c.l.b16 %v750
  %v854 = vunpack.c.h.b16 %v750
  %v855 = vunpack.c.l.b16 %v751
  %v856 = vunpack.c.h.b16 %v751
  %v857 = vunpack.c.l.b16 %v752
  %v858 = vunpack.c.h.b16 %v752
  %v859 = vunpack.c.l.b16 %v753
  %v860 = vunpack.c.h.b16 %v753
  %v861 = vunpack.c.l.b16 %v754
  %v862 = vunpack.c.h.b16 %v754
  %v863 = vunpack.c.l.b16 %v755
  %v864 = vunpack.c.h.b16 %v755
  %v865 = vunpack.c.l.b16 %v756
  %v866 = vunpack.c.h.b16 %v756
  %v867 = vunpack.c.l.b16 %v757
  %v868 = vunpack.c.h.b16 %v757
  %v869 = vunpack.c.l.b16 %v758
  %v870 = vunpack.c.h.b16 %v758
  %v871 = vunpack.c.l.b16 %v759
  %v872 = vunpack.c.h.b16 %v759
  %v873 = vunpack.c.l.b16 %v760
  %v874 = vunpack.c.h.b16 %v760
  %v875 = vunpack.c.l.b16 %v761
  %v876 = vunpack.c.h.b16 %v761
  %v877 = vunpack.c.l.b16 %v762
  %v878 = vunpack.c.h.b16 %v762
  %v879 = vunpack.c.l.b16 %v763
  %v880 = vunpack.c.h.b16 %v763
  %v881 = vunpack.c.l.b16 %v764
  %v882 = vunpack.c.h.b16 %v764
  %v883 = vunpack.c.l.b16 %v765
  %v884 = vunpack.c.h.b16 %v765
  %v885 = vunpack.c.l.b16 %v766
  %v886 = vunpack.c.h.b16 %v766
  %v887 = vunpack.c.l.b16 %v767
  %v888 = vunpack.c.h.b16 %v767
  %v889 = vunpack.c.l.b16 %v768
  %v890 = vunpack.c.h.b16 %v768
  %v891 = vunpack.c.l.b16 %v769
  %v892 = vunpack.c.h.b16 %v769
  %v893 = vunpack.c.l.b16 %v770
  %v894 = vunpack.c.h.b16 %v770
  %v895 = vunpack.c.l.b16 %v771
  %v896 = vunpack.c.h.b16 %v771
  %v897 = vunpack.c.l.b16 %v772
  %v898 = vunpack.c.h.b16 %v772
  %v899 = vunpack.c.l.b16 %v773
  %v900 = vunpack.c.h.b16 %v773
  %v901 = vunpack.c.l.b16 %v774
  %v902 = vunpack.c.h.b16 %v774
  %v903 = vunpack.c.l.b16 %v775
  %v904 = vunpack.c.h.b16 %v775
  %v905 = vunpack.c.l.b16 %v776
  %v906 = vunpack.c.h.b16 %v776
  %v907 = vunpack.c.l.b16 %v777
  %v908 = vunpack.c.h.b16 %v777
  %v909 = vunpack.c.l.b16 %v778
  %v910 = vunpack.c.h.b16 %v778
  %v911 = vunpack.c.l.b16 %v779
  %v912 = vunpack.c.h.b16 %v779
  %v913 = vunpack.c.l.b16 %v780
  %v914 = vunpack.c.h.b16 %v780
  %v915 = vunpack.c.l.b16 %v781
  %v916 = vunpack.c.h.b16 %v781
  %v917 = vunpack.c.l.b16 %v782
  %v918 = vunpack.c.h.b16 %v782
  %v919 = vunpack.c.l.b16 %v783
  %v920 = vunpack.c.h.b16 %v783
  %v921 = vunpack.c.l.b16 %v784
  %v922 = vunpack.c.h.b16 %v784
  %v923 = vunpack.c.l.b16 %v785
  %v924 = vunpack.c.h.b16 %v785
  %v925 = vunpack.c.l.b16 %v786
  %v926 = vunpack.c.h.b16 %v786
  %v927 = vunpack.c.l.b16 %v787
  %v928 = vunpack.c.h.b16 %v787
  %v929 = vunpack.c.l.b16 %v788
  %v930 = vunpack.c.h.b16 %v788
  %v931 = vunpack.c.l.b16 %v789
  %v932 = vunpack.c.h.b16 %v789
  %v933 = vunpack.c.l.b16 %v790
  %v934 = vunpack.c.h.b16 %v790
  %v935 = vunpack.c.l.b16 %v791
  %v936 = vunpack.c.h.b16 %v791
  %v937 = vunpack.c.l.b16 %v792
  %v938 = vunpack.c.h.b16 %v792
  %v939 = vunpack.c.l.b16 %v793
  %v940 = vunpack.c.h.b16 %v793
  %v941 = vunpack.c.l.b16 %v794
  %v942 = vunpack.c.h.b16 %v794
  %v943 = vunpack.c.l.b16 %v795
  %v944 = vunpack.c.h.b16 %v795
  %v945 = vunpack.c.l.b16 %v796
  %v946 = vunpack.c.h.b16 %v796
  %v947 = vpack.c.b16 %v853, %v851
  %v948 = vpack.c.b16 %v854, %v852
  %v949 = vpack.c.b16 %v857, %v855
  %v950 = vpack.c.b16 %v858, %v856
  %v951 = vpack.c.b16 %v861, %v859
  %v952 = vpack.c.b16 %v862, %v860
  %v953 = vpack.c.b16 %v865, %v863
  %v954 = vpack.c.b16 %v866, %v864
  %v955 = vpack.c.b16 %v869, %v867
  %v956 = vpack.c.b16 %v870, %v868
  %v957 = vpack.c.b16 %v873, %v871
  %v958 = vpack.c.b16 %v874, %v872
  %v959 = vpack.c.b16 %v877, %v875
  %v960 = vpack.c.b16 %v878, %v876
  %v961 = vpack.c.b16 %v881, %v879
  %v962 = vpack.c.b16 %v882, %v880
  %v963 = vpack.c.b16 %v885, %v883
  %v964 = vpack.c.b16 %v886, %v884
  %v965 = vpack.c.b16 %v889, %v887
  %v966 = vpack.c.b16 %v890, %v888
  %v967 = vpack.c.b16 %v893, %v891
  %v968 = vpack.c.b16 %v894, %v892
  %v969 = vpack.c.b16 %v897, %v895
  %v970 = vpack.c.b16 %v898, %v896
  %v971 = vpack.c.b16 %v901, %v899
  %v972 = vpack.c.b16 %v902, %v900
  %v973 = vpack.c.b16 %v905, %v903
  %v974 = vpack.c.b16 %v906, %v904
  %v975 = vpack.c.b16 %v909, %v907
  %v976 = vpack.c.b16 %v910, %v908
  %v977 = vpack.c.b16 %v913, %v911
  %v978 = vpack.c.b16 %v914, %v912
  %v979 = vpack.c.b16 %v917, %v915
  %v980 = vpack.c.b16 %v918, %v916
  %v981 = vpack.c.b16 %v921, %v919
  %v982 = vpack.c.b16 %v922, %v920
  %v983 = vpack.c.b16 %v925, %v923
  %v984 = vpack.c.b16 %v926, %v924
  %v985 = vpack.c.b16 %v929, %v927
  %v986 = vpack.c.b16 %v930, %v928
  %v987 = vpack.c.b16 %v933, %v931
  %v988 = vpack.c.b16 %v934, %v932
  %v989 = vpack.c.b16 %v937, %v935
  %v990 = vpack.c.b16 %v938, %v936
  %v991 = vpack.c.b16 %v941, %v939
  %v992 = vpack.c.b16 %v942, %v940
  %v993 = vpack.c.b16 %v945, %v943
  %v994 = vpack.c.b16 %v946, %v944
  %1043 = vmatpush.bf16.msra.mxu0 %v961
  %1044 = vmatpush.bf16.msra.mxu0 %v959
  %1045 = vmatpush.bf16.msra.mxu0 %v957
  %1046 = vmatpush.bf16.msra.mxu0 %v955
  %1047 = vmatpush.bf16.msra.mxu0 %v953
  %1048 = vmatpush.bf16.msra.mxu0 %v951
  %1049 = vmatpush.bf16.msra.mxu0 %v949
  %1050 = vmatpush.bf16.msra.mxu0 %v947
  %1051 = vmatmul.bf16.gmra.mxu0 %v746
  %v1052 = vpop.f32.mrf.mxu0
  %v1053 = vadd.f32 %v799, %v1052
  %v1054 = vpop.f32.mrf.mxu0
  %v1055 = vadd.f32 %v799, %v1054
  %1056 = vdwg.mxu0
  %1057 = vmatpush.bf16.msra.mxu0 %v977
  %1058 = vmatpush.bf16.msra.mxu0 %v975
  %1059 = vmatpush.bf16.msra.mxu0 %v973
  %1060 = vmatpush.bf16.msra.mxu0 %v971
  %1061 = vmatpush.bf16.msra.mxu0 %v969
  %1062 = vmatpush.bf16.msra.mxu0 %v967
  %1063 = vmatpush.bf16.msra.mxu0 %v965
  %1064 = vmatpush.bf16.msra.mxu0 %v963
  %1065 = vmatmul.bf16.gmra.mxu0 %v747
  %v1066 = vpop.f32.mrf.mxu0
  %v1067 = vadd.f32 %v1053, %v1066
  %v1068 = vpop.f32.mrf.mxu0
  %v1069 = vadd.f32 %v1055, %v1068
  %1070 = vdwg.mxu0
  %1071 = vmatpush.bf16.msra.mxu0 %v993
  %1072 = vmatpush.bf16.msra.mxu0 %v991
  %1073 = vmatpush.bf16.msra.mxu0 %v989
  %1074 = vmatpush.bf16.msra.mxu0 %v987
  %1075 = vmatpush.bf16.msra.mxu0 %v985
  %1076 = vmatpush.bf16.msra.mxu0 %v983
  %1077 = vmatpush.bf16.msra.mxu0 %v981
  %1078 = vmatpush.bf16.msra.mxu0 %v979
  %1079 = vmatmul.bf16.gmra.mxu0 %v748
  %v1080 = vpop.f32.mrf.mxu0
  %v1081 = vadd.f32 %v1067, %v1080
  %v1082 = vpop.f32.mrf.mxu0
  %v1083 = vadd.f32 %v1069, %v1082
  %1084 = vdwg.mxu0
  %1085 = vmatpush.bf16.msra.mxu0 %v962
  %1086 = vmatpush.bf16.msra.mxu0 %v960
  %1087 = vmatpush.bf16.msra.mxu0 %v958
  %1088 = vmatpush.bf16.msra.mxu0 %v956
  %1089 = vmatpush.bf16.msra.mxu0 %v954
  %1090 = vmatpush.bf16.msra.mxu0 %v952
  %1091 = vmatpush.bf16.msra.mxu0 %v950
  %1092 = vmatpush.bf16.msra.mxu0 %v948
  %1093 = vmatmul.bf16.gmra.mxu0 %v746
  %v1094 = vpop.f32.mrf.mxu0
  %v1095 = vadd.f32 %v800, %v1094
  %v1096 = vpop.f32.mrf.mxu0
  %v1097 = vadd.f32 %v800, %v1096
  %1098 = vdwg.mxu0
  %1099 = vmatpush.bf16.msra.mxu0 %v978
  %1100 = vmatpush.bf16.msra.mxu0 %v976
  %1101 = vmatpush.bf16.msra.mxu0 %v974
  %1102 = vmatpush.bf16.msra.mxu0 %v972
  %1103 = vmatpush.bf16.msra.mxu0 %v970
  %1104 = vmatpush.bf16.msra.mxu0 %v968
  %1105 = vmatpush.bf16.msra.mxu0 %v966
  %1106 = vmatpush.bf16.msra.mxu0 %v964
  %1107 = vmatmul.bf16.gmra.mxu0 %v747
  %v1108 = vpop.f32.mrf.mxu0
  %v1109 = vadd.f32 %v1095, %v1108
  %v1110 = vpop.f32.mrf.mxu0
  %v1111 = vadd.f32 %v1097, %v1110
  %1112 = vdwg.mxu0
  %1113 = vmatpush.bf16.msra.mxu0 %v994
  %1114 = vmatpush.bf16.msra.mxu0 %v992
  %1115 = vmatpush.bf16.msra.mxu0 %v990
  %1116 = vmatpush.bf16.msra.mxu0 %v988
  %1117 = vmatpush.bf16.msra.mxu0 %v986
  %1118 = vmatpush.bf16.msra.mxu0 %v984
  %1119 = vmatpush.bf16.msra.mxu0 %v982
  %1120 = vmatpush.bf16.msra.mxu0 %v980
  %1121 = vmatmul.bf16.gmra.mxu0 %v748
  %v1122 = vpop.f32.mrf.mxu0
  %v1123 = vadd.f32 %v1109, %v1122
  %v1124 = vpop.f32.mrf.mxu0
  %v1125 = vadd.f32 %v1111, %v1124
  %1126 = vdwg.mxu0
  %v1127 = vxor.u32 %v1081, 2147483648
  %v1128 = vxor.u32 %v1123, 2147483648
  %v1129 = vxor.u32 %v1083, 2147483648
  %v1130 = vxor.u32 %v1125, 2147483648
  %v1131 = vmul.f32 %v1127, 1.442695
  %v1132 = vpow.pop %v1131
  %v1133 = vmul.f32 %v1128, 1.442695
  %v1134 = vpow.pop %v1133
  %v1135 = vmul.f32 %v1129, 1.442695
  %v1136 = vpow.pop %v1135
  %v1137 = vmul.f32 %v1130, 1.442695
  %v1138 = vpow.pop %v1137
  %v1139 = vadd.f32 %v1132, 1.0
  %v1140 = vadd.f32 %v1134, 1.0
  %v1141 = vadd.f32 %v1136, 1.0
  %v1142 = vadd.f32 %v1138, 1.0
  %v1143 = vrcp.pop %v1139
  %v1144 = vmul.f32 %v1139, %v1143
  %v1145 = vsub.f32 1.0, %v1144
  %v1146 = vmul.f32 %v1143, %v1145
  %v1147 = vadd.f32 %v1143, %v1146
  %vm1148 = vweird.f32 %v1139
  %vm1149 = vweird.f32 %v1143
  %vm1150 = vmor %vm1148, %vm1149
  %v1151 = vsel %vm1150, %v1143, %v1147
  %v1152 = vand.u32 2147483647, %v1139
  %vm1153 = vcmp.eq.f32.partialorder %v1152, 8.507059e+37
  %v1154 = vand.u32 %v1139, 2147483648
  %v1155 = vor.u32 1.1754944e-38, %v1154
  %v1156 = vsel %vm1153, %v1155, %v1151
  %v1157 = vmul.f32 1.0, %v1156
  %v1158 = vrcp.pop %v1140
  %v1159 = vmul.f32 %v1140, %v1158
  %v1160 = vsub.f32 1.0, %v1159
  %v1161 = vmul.f32 %v1158, %v1160
  %v1162 = vadd.f32 %v1158, %v1161
  %vm1163 = vweird.f32 %v1140
  %vm1164 = vweird.f32 %v1158
  %vm1165 = vmor %vm1163, %vm1164
  %v1166 = vsel %vm1165, %v1158, %v1162
  %v1167 = vand.u32 2147483647, %v1140
  %vm1168 = vcmp.eq.f32.partialorder %v1167, 8.507059e+37
  %v1169 = vand.u32 %v1140, 2147483648
  %v1170 = vor.u32 1.1754944e-38, %v1169
  %v1171 = vsel %vm1168, %v1170, %v1166
  %v1172 = vmul.f32 1.0, %v1171
  %v1173 = vrcp.pop %v1141
  %v1174 = vmul.f32 %v1141, %v1173
  %v1175 = vsub.f32 1.0, %v1174
  %v1176 = vmul.f32 %v1173, %v1175
  %v1177 = vadd.f32 %v1173, %v1176
  %vm1178 = vweird.f32 %v1141
  %vm1179 = vweird.f32 %v1173
  %vm1180 = vmor %vm1178, %vm1179
  %v1181 = vsel %vm1180, %v1173, %v1177
  %v1182 = vand.u32 2147483647, %v1141
  %vm1183 = vcmp.eq.f32.partialorder %v1182, 8.507059e+37
  %v1184 = vand.u32 %v1141, 2147483648
  %v1185 = vor.u32 1.1754944e-38, %v1184
  %v1186 = vsel %vm1183, %v1185, %v1181
  %v1187 = vmul.f32 1.0, %v1186
  %v1188 = vrcp.pop %v1142
  %v1189 = vmul.f32 %v1142, %v1188
  %v1190 = vsub.f32 1.0, %v1189
  %v1191 = vmul.f32 %v1188, %v1190
  %v1192 = vadd.f32 %v1188, %v1191
  %vm1193 = vweird.f32 %v1142
  %vm1194 = vweird.f32 %v1188
  %vm1195 = vmor %vm1193, %vm1194
  %v1196 = vsel %vm1195, %v1188, %v1192
  %v1197 = vand.u32 2147483647, %v1142
  %vm1198 = vcmp.eq.f32.partialorder %v1197, 8.507059e+37
  %v1199 = vand.u32 %v1142, 2147483648
  %v1200 = vor.u32 1.1754944e-38, %v1199
  %v1201 = vsel %vm1198, %v1200, %v1196
  %v1202 = vmul.f32 1.0, %v1201
  %v1203 = vmul.f32 %v1081, %v1157
  %v1204 = vmul.f32 %v1123, %v1172
  %v1205 = vmul.f32 %v1083, %v1187
  %v1206 = vmul.f32 %v1125, %v1202
  %v1207 = vpack.c.bf16 %v1205, %v1203
  %v1208 = vpack.c.bf16 %v1206, %v1204
  %v1209 = vld [vmem:[%s4] sm:$0xff]
  %v1210 = vld [vmem:[%s4 + $0x8] sm:$0xff]
  %v1211 = vld [vmem:[%s4 + $0x10] sm:$0xff]
  %v1212 = vld [vmem:[%s4 + $0x18] sm:$0xff]
  %v1213 = vld [vmem:[%s4 + $0x20] sm:$0xff]
  %v1214 = vld [vmem:[%s4 + $0x28] sm:$0xff]
  %v1215 = vld [vmem:[%s4 + $0x30] sm:$0xff]
  %v1216 = vld [vmem:[%s4 + $0x38] sm:$0xff]
  %v1217 = vld [vmem:[%s4 + $0x40] sm:$0xff]
  %v1218 = vld [vmem:[%s4 + $0x48] sm:$0xff]
  %v1219 = vld [vmem:[%s4 + $0x50] sm:$0xff]
  %v1220 = vld [vmem:[%s4 + $0x58] sm:$0xff]
  %v1221 = vld [vmem:[%s4 + $0x60] sm:$0xff]
  %v1222 = vld [vmem:[%s4 + $0x68] sm:$0xff]
  %v1223 = vld [vmem:[%s4 + $0x70] sm:$0xff]
  %v1224 = vld [vmem:[%s4 + $0x78] sm:$0xff]
  %v1225 = vld [vmem:[%s4 + $0x80] sm:$0xff]
  %v1226 = vld [vmem:[%s4 + $0x88] sm:$0xff]
  %v1227 = vld [vmem:[%s4 + $0x90] sm:$0xff]
  %v1228 = vld [vmem:[%s4 + $0x98] sm:$0xff]
  %v1229 = vld [vmem:[%s4 + $0xa0] sm:$0xff]
  %v1230 = vld [vmem:[%s4 + $0xa8] sm:$0xff]
  %v1231 = vld [vmem:[%s4 + $0xb0] sm:$0xff]
  %v1232 = vld [vmem:[%s4 + $0xb8] sm:$0xff]
  %v1233 = vld [vmem:[%s4 + $0xc0] sm:$0xff]
  %v1234 = vld [vmem:[%s4 + $0xc8] sm:$0xff]
  %v1235 = vld [vmem:[%s4 + $0xd0] sm:$0xff]
  %v1236 = vld [vmem:[%s4 + $0xd8] sm:$0xff]
  %v1237 = vld [vmem:[%s4 + $0xe0] sm:$0xff]
  %v1238 = vld [vmem:[%s4 + $0xe8] sm:$0xff]
  %v1239 = vld [vmem:[%s4 + $0xf0] sm:$0xff]
  %v1240 = vld [vmem:[%s4 + $0xf8] sm:$0xff]
  %v1241 = vld [vmem:[%s4 + $0x100] sm:$0xff]
  %v1242 = vld [vmem:[%s4 + $0x108] sm:$0xff]
  %v1243 = vld [vmem:[%s4 + $0x110] sm:$0xff]
  %v1244 = vld [vmem:[%s4 + $0x118] sm:$0xff]
  %v1245 = vld [vmem:[%s4 + $0x120] sm:$0xff]
  %v1246 = vld [vmem:[%s4 + $0x128] sm:$0xff]
  %v1247 = vld [vmem:[%s4 + $0x130] sm:$0xff]
  %v1248 = vld [vmem:[%s4 + $0x138] sm:$0xff]
  %v1249 = vld [vmem:[%s4 + $0x140] sm:$0xff]
  %v1250 = vld [vmem:[%s4 + $0x148] sm:$0xff]
  %v1251 = vld [vmem:[%s4 + $0x150] sm:$0xff]
  %v1252 = vld [vmem:[%s4 + $0x158] sm:$0xff]
  %v1253 = vld [vmem:[%s4 + $0x160] sm:$0xff]
  %v1254 = vld [vmem:[%s4 + $0x168] sm:$0xff]
  %v1255 = vld [vmem:[%s4 + $0x170] sm:$0xff]
  %v1256 = vld [vmem:[%s4 + $0x178] sm:$0xff]
  %v1257 = vld [vmem:[%s4 + $0x180] sm:$0xff]
  %v1258 = vld [vmem:[%s4 + $0x188] sm:$0xff]
  %v1259 = vld [vmem:[%s4 + $0x190] sm:$0xff]
  %v1260 = vld [vmem:[%s4 + $0x198] sm:$0xff]
  %v1261 = vld [vmem:[%s4 + $0x1a0] sm:$0xff]
  %v1262 = vld [vmem:[%s4 + $0x1a8] sm:$0xff]
  %v1263 = vld [vmem:[%s4 + $0x1b0] sm:$0xff]
  %v1264 = vld [vmem:[%s4 + $0x1b8] sm:$0xff]
  %v1265 = vld [vmem:[%s4 + $0x1c0] sm:$0xff]
  %v1266 = vld [vmem:[%s4 + $0x1c8] sm:$0xff]
  %v1267 = vld [vmem:[%s4 + $0x1d0] sm:$0xff]
  %v1268 = vld [vmem:[%s4 + $0x1d8] sm:$0xff]
  %v1269 = vld [vmem:[%s4 + $0x1e0] sm:$0xff]
  %v1270 = vld [vmem:[%s4 + $0x1e8] sm:$0xff]
  %v1271 = vld [vmem:[%s4 + $0x1f0] sm:$0xff]
  %v1272 = vld [vmem:[%s4 + $0x1f8] sm:$0xff]
  %v1273 = vld [vmem:[%s5] sm:$0xf]
  %v1275 = vperm.slane %v1273, 0
  %v1276 = vperm.slane %v1273, 1
  %v1277 = vperm.slane %v1273, 2
  %v1278 = vperm.slane %v1273, 3
  %v1347 = vunpack.c.l.b16 %v1209
  %v1348 = vunpack.c.h.b16 %v1209
  %v1349 = vunpack.c.l.b16 %v1210
  %v1350 = vunpack.c.h.b16 %v1210
  %v1351 = vunpack.c.l.b16 %v1211
  %v1352 = vunpack.c.h.b16 %v1211
  %v1353 = vunpack.c.l.b16 %v1212
  %v1354 = vunpack.c.h.b16 %v1212
  %v1355 = vunpack.c.l.b16 %v1213
  %v1356 = vunpack.c.h.b16 %v1213
  %v1357 = vunpack.c.l.b16 %v1214
  %v1358 = vunpack.c.h.b16 %v1214
  %v1359 = vunpack.c.l.b16 %v1215
  %v1360 = vunpack.c.h.b16 %v1215
  %v1361 = vunpack.c.l.b16 %v1216
  %v1362 = vunpack.c.h.b16 %v1216
  %v1363 = vunpack.c.l.b16 %v1217
  %v1364 = vunpack.c.h.b16 %v1217
  %v1365 = vunpack.c.l.b16 %v1218
  %v1366 = vunpack.c.h.b16 %v1218
  %v1367 = vunpack.c.l.b16 %v1219
  %v1368 = vunpack.c.h.b16 %v1219
  %v1369 = vunpack.c.l.b16 %v1220
  %v1370 = vunpack.c.h.b16 %v1220
  %v1371 = vunpack.c.l.b16 %v1221
  %v1372 = vunpack.c.h.b16 %v1221
  %v1373 = vunpack.c.l.b16 %v1222
  %v1374 = vunpack.c.h.b16 %v1222
  %v1375 = vunpack.c.l.b16 %v1223
  %v1376 = vunpack.c.h.b16 %v1223
  %v1377 = vunpack.c.l.b16 %v1224
  %v1378 = vunpack.c.h.b16 %v1224
  %v1379 = vunpack.c.l.b16 %v1225
  %v1380 = vunpack.c.h.b16 %v1225
  %v1381 = vunpack.c.l.b16 %v1226
  %v1382 = vunpack.c.h.b16 %v1226
  %v1383 = vunpack.c.l.b16 %v1227
  %v1384 = vunpack.c.h.b16 %v1227
  %v1385 = vunpack.c.l.b16 %v1228
  %v1386 = vunpack.c.h.b16 %v1228
  %v1387 = vunpack.c.l.b16 %v1229
  %v1388 = vunpack.c.h.b16 %v1229
  %v1389 = vunpack.c.l.b16 %v1230
  %v1390 = vunpack.c.h.b16 %v1230
  %v1391 = vunpack.c.l.b16 %v1231
  %v1392 = vunpack.c.h.b16 %v1231
  %v1393 = vunpack.c.l.b16 %v1232
  %v1394 = vunpack.c.h.b16 %v1232
  %v1395 = vunpack.c.l.b16 %v1233
  %v1396 = vunpack.c.h.b16 %v1233
  %v1397 = vunpack.c.l.b16 %v1234
  %v1398 = vunpack.c.h.b16 %v1234
  %v1399 = vunpack.c.l.b16 %v1235
  %v1400 = vunpack.c.h.b16 %v1235
  %v1401 = vunpack.c.l.b16 %v1236
  %v1402 = vunpack.c.h.b16 %v1236
  %v1403 = vunpack.c.l.b16 %v1237
  %v1404 = vunpack.c.h.b16 %v1237
  %v1405 = vunpack.c.l.b16 %v1238
  %v1406 = vunpack.c.h.b16 %v1238
  %v1407 = vunpack.c.l.b16 %v1239
  %v1408 = vunpack.c.h.b16 %v1239
  %v1409 = vunpack.c.l.b16 %v1240
  %v1410 = vunpack.c.h.b16 %v1240
  %v1411 = vunpack.c.l.b16 %v1241
  %v1412 = vunpack.c.h.b16 %v1241
  %v1413 = vunpack.c.l.b16 %v1242
  %v1414 = vunpack.c.h.b16 %v1242
  %v1415 = vunpack.c.l.b16 %v1243
  %v1416 = vunpack.c.h.b16 %v1243
  %v1417 = vunpack.c.l.b16 %v1244
  %v1418 = vunpack.c.h.b16 %v1244
  %v1419 = vunpack.c.l.b16 %v1245
  %v1420 = vunpack.c.h.b16 %v1245
  %v1421 = vunpack.c.l.b16 %v1246
  %v1422 = vunpack.c.h.b16 %v1246
  %v1423 = vunpack.c.l.b16 %v1247
  %v1424 = vunpack.c.h.b16 %v1247
  %v1425 = vunpack.c.l.b16 %v1248
  %v1426 = vunpack.c.h.b16 %v1248
  %v1427 = vunpack.c.l.b16 %v1249
  %v1428 = vunpack.c.h.b16 %v1249
  %v1429 = vunpack.c.l.b16 %v1250
  %v1430 = vunpack.c.h.b16 %v1250
  %v1431 = vunpack.c.l.b16 %v1251
  %v1432 = vunpack.c.h.b16 %v1251
  %v1433 = vunpack.c.l.b16 %v1252
  %v1434 = vunpack.c.h.b16 %v1252
  %v1435 = vunpack.c.l.b16 %v1253
  %v1436 = vunpack.c.h.b16 %v1253
  %v1437 = vunpack.c.l.b16 %v1254
  %v1438 = vunpack.c.h.b16 %v1254
  %v1439 = vunpack.c.l.b16 %v1255
  %v1440 = vunpack.c.h.b16 %v1255
  %v1441 = vunpack.c.l.b16 %v1256
  %v1442 = vunpack.c.h.b16 %v1256
  %v1443 = vunpack.c.l.b16 %v1257
  %v1444 = vunpack.c.h.b16 %v1257
  %v1445 = vunpack.c.l.b16 %v1258
  %v1446 = vunpack.c.h.b16 %v1258
  %v1447 = vunpack.c.l.b16 %v1259
  %v1448 = vunpack.c.h.b16 %v1259
  %v1449 = vunpack.c.l.b16 %v1260
  %v1450 = vunpack.c.h.b16 %v1260
  %v1451 = vunpack.c.l.b16 %v1261
  %v1452 = vunpack.c.h.b16 %v1261
  %v1453 = vunpack.c.l.b16 %v1262
  %v1454 = vunpack.c.h.b16 %v1262
  %v1455 = vunpack.c.l.b16 %v1263
  %v1456 = vunpack.c.h.b16 %v1263
  %v1457 = vunpack.c.l.b16 %v1264
  %v1458 = vunpack.c.h.b16 %v1264
  %v1459 = vunpack.c.l.b16 %v1265
  %v1460 = vunpack.c.h.b16 %v1265
  %v1461 = vunpack.c.l.b16 %v1266
  %v1462 = vunpack.c.h.b16 %v1266
  %v1463 = vunpack.c.l.b16 %v1267
  %v1464 = vunpack.c.h.b16 %v1267
  %v1465 = vunpack.c.l.b16 %v1268
  %v1466 = vunpack.c.h.b16 %v1268
  %v1467 = vunpack.c.l.b16 %v1269
  %v1468 = vunpack.c.h.b16 %v1269
  %v1469 = vunpack.c.l.b16 %v1270
  %v1470 = vunpack.c.h.b16 %v1270
  %v1471 = vunpack.c.l.b16 %v1271
  %v1472 = vunpack.c.h.b16 %v1271
  %v1473 = vunpack.c.l.b16 %v1272
  %v1474 = vunpack.c.h.b16 %v1272
  %v1475 = vpack.c.b16 %v1351, %v1347
  %v1476 = vpack.c.b16 %v1352, %v1348
  %v1477 = vpack.c.b16 %v1353, %v1349
  %v1478 = vpack.c.b16 %v1354, %v1350
  %v1479 = vpack.c.b16 %v1359, %v1355
  %v1480 = vpack.c.b16 %v1360, %v1356
  %v1481 = vpack.c.b16 %v1361, %v1357
  %v1482 = vpack.c.b16 %v1362, %v1358
  %v1483 = vpack.c.b16 %v1367, %v1363
  %v1484 = vpack.c.b16 %v1368, %v1364
  %v1485 = vpack.c.b16 %v1369, %v1365
  %v1486 = vpack.c.b16 %v1370, %v1366
  %v1487 = vpack.c.b16 %v1375, %v1371
  %v1488 = vpack.c.b16 %v1376, %v1372
  %v1489 = vpack.c.b16 %v1377, %v1373
  %v1490 = vpack.c.b16 %v1378, %v1374
  %v1491 = vpack.c.b16 %v1383, %v1379
  %v1492 = vpack.c.b16 %v1384, %v1380
  %v1493 = vpack.c.b16 %v1385, %v1381
  %v1494 = vpack.c.b16 %v1386, %v1382
  %v1495 = vpack.c.b16 %v1391, %v1387
  %v1496 = vpack.c.b16 %v1392, %v1388
  %v1497 = vpack.c.b16 %v1393, %v1389
  %v1498 = vpack.c.b16 %v1394, %v1390
  %v1499 = vpack.c.b16 %v1399, %v1395
  %v1500 = vpack.c.b16 %v1400, %v1396
  %v1501 = vpack.c.b16 %v1401, %v1397
  %v1502 = vpack.c.b16 %v1402, %v1398
  %v1503 = vpack.c.b16 %v1407, %v1403
  %v1504 = vpack.c.b16 %v1408, %v1404
  %v1505 = vpack.c.b16 %v1409, %v1405
  %v1506 = vpack.c.b16 %v1410, %v1406
  %v1507 = vpack.c.b16 %v1415, %v1411
  %v1508 = vpack.c.b16 %v1416, %v1412
  %v1509 = vpack.c.b16 %v1417, %v1413
  %v1510 = vpack.c.b16 %v1418, %v1414
  %v1511 = vpack.c.b16 %v1423, %v1419
  %v1512 = vpack.c.b16 %v1424, %v1420
  %v1513 = vpack.c.b16 %v1425, %v1421
  %v1514 = vpack.c.b16 %v1426, %v1422
  %v1515 = vpack.c.b16 %v1431, %v1427
  %v1516 = vpack.c.b16 %v1432, %v1428
  %v1517 = vpack.c.b16 %v1433, %v1429
  %v1518 = vpack.c.b16 %v1434, %v1430
  %v1519 = vpack.c.b16 %v1439, %v1435
  %v1520 = vpack.c.b16 %v1440, %v1436
  %v1521 = vpack.c.b16 %v1441, %v1437
  %v1522 = vpack.c.b16 %v1442, %v1438
  %v1523 = vpack.c.b16 %v1447, %v1443
  %v1524 = vpack.c.b16 %v1448, %v1444
  %v1525 = vpack.c.b16 %v1449, %v1445
  %v1526 = vpack.c.b16 %v1450, %v1446
  %v1527 = vpack.c.b16 %v1455, %v1451
  %v1528 = vpack.c.b16 %v1456, %v1452
  %v1529 = vpack.c.b16 %v1457, %v1453
  %v1530 = vpack.c.b16 %v1458, %v1454
  %v1531 = vpack.c.b16 %v1463, %v1459
  %v1532 = vpack.c.b16 %v1464, %v1460
  %v1533 = vpack.c.b16 %v1465, %v1461
  %v1534 = vpack.c.b16 %v1466, %v1462
  %v1535 = vpack.c.b16 %v1471, %v1467
  %v1536 = vpack.c.b16 %v1472, %v1468
  %v1537 = vpack.c.b16 %v1473, %v1469
  %v1538 = vpack.c.b16 %v1474, %v1470
  %1603 = vmatpush.bf16.msra.mxu0 %v1503
  %1604 = vmatpush.bf16.msra.mxu0 %v1499
  %1605 = vmatpush.bf16.msra.mxu0 %v1495
  %1606 = vmatpush.bf16.msra.mxu0 %v1491
  %1607 = vmatpush.bf16.msra.mxu0 %v1487
  %1608 = vmatpush.bf16.msra.mxu0 %v1483
  %1609 = vmatpush.bf16.msra.mxu0 %v1479
  %1610 = vmatpush.bf16.msra.mxu0 %v1475
  %1611 = vmatmul.bf16.gmra.mxu0 %v1207
  %v1612 = vpop.f32.mrf.mxu0
  %v1613 = vadd.f32 %v1275, %v1612
  %v1614 = vpop.f32.mrf.mxu0
  %v1615 = vadd.f32 %v1275, %v1614
  %1616 = vdwg.mxu0
  %1617 = vmatpush.bf16.msra.mxu0 %v1535
  %1618 = vmatpush.bf16.msra.mxu0 %v1531
  %1619 = vmatpush.bf16.msra.mxu0 %v1527
  %1620 = vmatpush.bf16.msra.mxu0 %v1523
  %1621 = vmatpush.bf16.msra.mxu0 %v1519
  %1622 = vmatpush.bf16.msra.mxu0 %v1515
  %1623 = vmatpush.bf16.msra.mxu0 %v1511
  %1624 = vmatpush.bf16.msra.mxu0 %v1507
  %1625 = vmatmul.bf16.gmra.mxu0 %v1208
  %v1626 = vpop.f32.mrf.mxu0
  %v1627 = vadd.f32 %v1613, %v1626
  %v1628 = vpop.f32.mrf.mxu0
  %v1629 = vadd.f32 %v1615, %v1628
  %1630 = vdwg.mxu0
  %1631 = vmatpush.bf16.msra.mxu0 %v1504
  %1632 = vmatpush.bf16.msra.mxu0 %v1500
  %1633 = vmatpush.bf16.msra.mxu0 %v1496
  %1634 = vmatpush.bf16.msra.mxu0 %v1492
  %1635 = vmatpush.bf16.msra.mxu0 %v1488
  %1636 = vmatpush.bf16.msra.mxu0 %v1484
  %1637 = vmatpush.bf16.msra.mxu0 %v1480
  %1638 = vmatpush.bf16.msra.mxu0 %v1476
  %1639 = vmatmul.bf16.gmra.mxu0 %v1207
  %v1640 = vpop.f32.mrf.mxu0
  %v1641 = vadd.f32 %v1276, %v1640
  %v1642 = vpop.f32.mrf.mxu0
  %v1643 = vadd.f32 %v1276, %v1642
  %1644 = vdwg.mxu0
  %1645 = vmatpush.bf16.msra.mxu0 %v1536
  %1646 = vmatpush.bf16.msra.mxu0 %v1532
  %1647 = vmatpush.bf16.msra.mxu0 %v1528
  %1648 = vmatpush.bf16.msra.mxu0 %v1524
  %1649 = vmatpush.bf16.msra.mxu0 %v1520
  %1650 = vmatpush.bf16.msra.mxu0 %v1516
  %1651 = vmatpush.bf16.msra.mxu0 %v1512
  %1652 = vmatpush.bf16.msra.mxu0 %v1508
  %1653 = vmatmul.bf16.gmra.mxu0 %v1208
  %v1654 = vpop.f32.mrf.mxu0
  %v1655 = vadd.f32 %v1641, %v1654
  %v1656 = vpop.f32.mrf.mxu0
  %v1657 = vadd.f32 %v1643, %v1656
  %1658 = vdwg.mxu0
  %1659 = vmatpush.bf16.msra.mxu0 %v1505
  %1660 = vmatpush.bf16.msra.mxu0 %v1501
  %1661 = vmatpush.bf16.msra.mxu0 %v1497
  %1662 = vmatpush.bf16.msra.mxu0 %v1493
  %1663 = vmatpush.bf16.msra.mxu0 %v1489
  %1664 = vmatpush.bf16.msra.mxu0 %v1485
  %1665 = vmatpush.bf16.msra.mxu0 %v1481
  %1666 = vmatpush.bf16.msra.mxu0 %v1477
  %1667 = vmatmul.bf16.gmra.mxu0 %v1207
  %v1668 = vpop.f32.mrf.mxu0
  %v1669 = vadd.f32 %v1277, %v1668
  %v1670 = vpop.f32.mrf.mxu0
  %v1671 = vadd.f32 %v1277, %v1670
  %1672 = vdwg.mxu0
  %1673 = vmatpush.bf16.msra.mxu0 %v1537
  %1674 = vmatpush.bf16.msra.mxu0 %v1533
  %1675 = vmatpush.bf16.msra.mxu0 %v1529
  %1676 = vmatpush.bf16.msra.mxu0 %v1525
  %1677 = vmatpush.bf16.msra.mxu0 %v1521
  %1678 = vmatpush.bf16.msra.mxu0 %v1517
  %1679 = vmatpush.bf16.msra.mxu0 %v1513
  %1680 = vmatpush.bf16.msra.mxu0 %v1509
  %1681 = vmatmul.bf16.gmra.mxu0 %v1208
  %v1682 = vpop.f32.mrf.mxu0
  %v1683 = vadd.f32 %v1669, %v1682
  %v1684 = vpop.f32.mrf.mxu0
  %v1685 = vadd.f32 %v1671, %v1684
  %1686 = vdwg.mxu0
  %1687 = vmatpush.bf16.msra.mxu0 %v1506
  %1688 = vmatpush.bf16.msra.mxu0 %v1502
  %1689 = vmatpush.bf16.msra.mxu0 %v1498
  %1690 = vmatpush.bf16.msra.mxu0 %v1494
  %1691 = vmatpush.bf16.msra.mxu0 %v1490
  %1692 = vmatpush.bf16.msra.mxu0 %v1486
  %1693 = vmatpush.bf16.msra.mxu0 %v1482
  %1694 = vmatpush.bf16.msra.mxu0 %v1478
  %1695 = vmatmul.bf16.gmra.mxu0 %v1207
  %v1696 = vpop.f32.mrf.mxu0
  %v1697 = vadd.f32 %v1278, %v1696
  %v1698 = vpop.f32.mrf.mxu0
  %v1699 = vadd.f32 %v1278, %v1698
  %1700 = vdwg.mxu0
  %1701 = vmatpush.bf16.msra.mxu0 %v1538
  %1702 = vmatpush.bf16.msra.mxu0 %v1534
  %1703 = vmatpush.bf16.msra.mxu0 %v1530
  %1704 = vmatpush.bf16.msra.mxu0 %v1526
  %1705 = vmatpush.bf16.msra.mxu0 %v1522
  %1706 = vmatpush.bf16.msra.mxu0 %v1518
  %1707 = vmatpush.bf16.msra.mxu0 %v1514
  %1708 = vmatpush.bf16.msra.mxu0 %v1510
  %1709 = vmatmul.bf16.gmra.mxu0 %v1208
  %v1710 = vpop.f32.mrf.mxu0
  %v1711 = vadd.f32 %v1697, %v1710
  %v1712 = vpop.f32.mrf.mxu0
  %v1713 = vadd.f32 %v1699, %v1712
  %1714 = vdwg.mxu0
  %v1715 = vmul.f32 %v1627, %v202
  %v1716 = vmul.f32 %v1629, %v204
  %v1717 = vadd.f32 %v24, %v1715
  %v1718 = vadd.f32 %v26, %v1716
  %v1719 = vmul.f32 %v1627, %v570
  %v1720 = vmul.f32 %v1629, %v572
  %1723 = vrot.lane.b32.xlu0 %v1719, 96
  %v1724 = vpop.permute.xlu0 %1723
  %1725 = vrot.lane.b32.xlu0 %v1720, 96
  %v1726 = vpop.permute.xlu0 %1725
  %v1729 = vadd.f32 %v1717, %v1724
  %v1730 = vadd.f32 %v1718, %v1726
  %1731 = vrot.lane.b32.xlu0 %v202, 96
  %v1732 = vpop.permute.xlu0 %1731
  %1733 = vrot.lane.b32.xlu0 %v204, 96
  %v1734 = vpop.permute.xlu0 %1733
  %v1737 = vmul.f32 %v1627, %v1732
  %v1738 = vmul.f32 %v1629, %v1734
  %1741 = vrot.lane.b32.xlu0 %v1737, 64
  %v1742 = vpop.permute.xlu0 %1741
  %1743 = vrot.lane.b32.xlu0 %v1738, 64
  %v1744 = vpop.permute.xlu0 %1743
  %v1747 = vadd.f32 %v1729, %v1742
  %v1748 = vadd.f32 %v1730, %v1744
  %1749 = vrot.lane.b32.xlu0 %v1737, 32
  %v1750 = vpop.permute.xlu0 %1749
  %1751 = vrot.lane.b32.xlu0 %v1738, 32
  %v1752 = vpop.permute.xlu0 %1751
  %v1755 = vadd.f32 %v24, %v1750
  %v1756 = vadd.f32 %v26, %v1752
  %v1759 = vmul.f32 %v1627, %v417
  %v1760 = vmul.f32 %v1629, %v421
  %v1761 = vadd.f32 %v1755, %v1759
  %v1762 = vadd.f32 %v1756, %v1760
  %1763 = vrot.lane.b32.xlu0 %v230, 64
  %v1764 = vpop.permute.xlu0 %1763
  %1765 = vrot.lane.b32.xlu0 %v232, 64
  %v1766 = vpop.permute.xlu0 %1765
  %v1769 = vmul.f32 %v1627, %v1764
  %v1770 = vmul.f32 %v1629, %v1766
  %1773 = vrot.lane.b32.xlu0 %v1769, 96
  %v1774 = vpop.permute.xlu0 %1773
  %1775 = vrot.lane.b32.xlu0 %v1770, 96
  %v1776 = vpop.permute.xlu0 %1775
  %v1779 = vadd.f32 %v1761, %v1774
  %v1780 = vadd.f32 %v1762, %v1776
  %1781 = vrot.lane.b32.xlu0 %v202, 64
  %v1782 = vpop.permute.xlu0 %1781
  %1783 = vrot.lane.b32.xlu0 %v204, 64
  %v1784 = vpop.permute.xlu0 %1783
  %v1787 = vmul.f32 %v1627, %v1782
  %v1788 = vmul.f32 %v1629, %v1784
  %1791 = vrot.lane.b32.xlu0 %v1787, 64
  %v1792 = vpop.permute.xlu0 %1791
  %1793 = vrot.lane.b32.xlu0 %v1788, 64
  %v1794 = vpop.permute.xlu0 %1793
  %v1797 = vadd.f32 %v24, %v1792
  %v1798 = vadd.f32 %v26, %v1794
  %v1799 = vmul.f32 %v1627, %v25
  %v1800 = vmul.f32 %v1629, %v27
  %1803 = vrot.lane.b32.xlu0 %v1799, 32
  %v1804 = vpop.permute.xlu0 %1803
  %1805 = vrot.lane.b32.xlu0 %v1800, 32
  %v1806 = vpop.permute.xlu0 %1805
  %v1809 = vadd.f32 %v1797, %v1804
  %v1810 = vadd.f32 %v1798, %v1806
  %v1813 = vmul.f32 %v1627, %v454
  %v1814 = vmul.f32 %v1629, %v458
  %v1815 = vadd.f32 %v1809, %v1813
  %v1816 = vadd.f32 %v1810, %v1814
  %1817 = vrot.lane.b32.xlu0 %v1799, 96
  %v1818 = vpop.permute.xlu0 %1817
  %1819 = vrot.lane.b32.xlu0 %v1800, 96
  %v1820 = vpop.permute.xlu0 %1819
  %v1823 = vadd.f32 %v25, %v1818
  %v1824 = vadd.f32 %v27, %v1820
  %v1825 = vmul.f32 %v1655, %v265
  %v1826 = vmul.f32 %v1657, %v277
  %1829 = vrot.lane.b32.xlu0 %v1825, 64
  %v1830 = vpop.permute.xlu0 %1829
  %1831 = vrot.lane.b32.xlu0 %v1826, 64
  %v1832 = vpop.permute.xlu0 %1831
  %v1835 = vadd.f32 %v1823, %v1830
  %v1836 = vadd.f32 %v1824, %v1832
  %v1837 = vmul.f32 %v1655, %v682
  %v1838 = vmul.f32 %v1657, %v684
  %1841 = vrot.lane.b32.xlu0 %v1837, 32
  %v1842 = vpop.permute.xlu0 %1841
  %1843 = vrot.lane.b32.xlu0 %v1838, 32
  %v1844 = vpop.permute.xlu0 %1843
  %v1847 = vadd.f32 %v1835, %v1842
  %v1848 = vadd.f32 %v1836, %v1844
  %v1849 = vmul.f32 %v1655, %v690
  %v1850 = vmul.f32 %v1657, %v692
  %v1851 = vadd.f32 %v1847, %v1849
  %v1852 = vadd.f32 %v1848, %v1850
  %v1853 = vmul.f32 %v1655, %v397
  %v1854 = vmul.f32 %v1657, %v409
  %1857 = vrot.lane.b32.xlu0 %v1853, 96
  %v1858 = vpop.permute.xlu0 %1857
  %1859 = vrot.lane.b32.xlu0 %v1854, 96
  %v1860 = vpop.permute.xlu0 %1859
  %v1863 = vadd.f32 %v1851, %v1858
  %v1864 = vadd.f32 %v1852, %v1860
  %v1865 = vmul.f32 %v1683, %v698
  %v1866 = vmul.f32 %v1685, %v700
  %1869 = vrot.lane.b32.xlu0 %v1865, 64
  %v1870 = vpop.permute.xlu0 %1869
  %1871 = vrot.lane.b32.xlu0 %v1866, 64
  %v1872 = vpop.permute.xlu0 %1871
  %v1875 = vadd.f32 %v1863, %v1870
  %v1876 = vadd.f32 %v1864, %v1872
  %1879 = vrot.lane.b32.xlu0 %v677, 32
  %v1880 = vpop.permute.xlu0 %1879
  %1881 = vrot.lane.b32.xlu0 %v678, 32
  %v1882 = vpop.permute.xlu0 %1881
  %v1885 = vmul.f32 %v1683, %v1880
  %v1886 = vmul.f32 %v1685, %v1882
  %v1887 = vadd.f32 %v1875, %v1885
  %v1888 = vadd.f32 %v1876, %v1886
  %v1889 = vmul.f32 %v1711, %v445
  %v1890 = vmul.f32 %v1713, %v446
  %1893 = vrot.lane.b32.xlu0 %v1889, 64
  %v1894 = vpop.permute.xlu0 %1893
  %1895 = vrot.lane.b32.xlu0 %v1890, 64
  %v1896 = vpop.permute.xlu0 %1895
  %v1899 = vadd.f32 %v1887, %v1894
  %v1900 = vadd.f32 %v1888, %v1896
  %1901 = vrot.lane.b32.xlu0 %v481, 32
  %v1902 = vpop.permute.xlu0 %1901
  %1903 = vrot.lane.b32.xlu0 %v482, 32
  %v1904 = vpop.permute.xlu0 %1903
  %v1907 = vmul.f32 %v1711, %v1902
  %v1908 = vmul.f32 %v1713, %v1904
  %1911 = vrot.lane.b32.xlu0 %v1907, 32
  %v1912 = vpop.permute.xlu0 %1911
  %1913 = vrot.lane.b32.xlu0 %v1908, 32
  %v1914 = vpop.permute.xlu0 %1913
  %v1917 = vadd.f32 %v1899, %v1912
  %v1918 = vadd.f32 %v1900, %v1914
  %1921 = vrot.lane.b32.xlu0 %v501, 64
  %v1922 = vpop.permute.xlu0 %1921
  %1923 = vrot.lane.b32.xlu0 %v502, 64
  %v1924 = vpop.permute.xlu0 %1923
  %v1927 = vmul.f32 %v1711, %v1922
  %v1928 = vmul.f32 %v1713, %v1924
  %v1929 = vadd.f32 %v1917, %v1927
  %v1930 = vadd.f32 %v1918, %v1928
  %1931 = vrot.lane.b32.xlu0 %v521, 96
  %v1932 = vpop.permute.xlu0 %1931
  %1933 = vrot.lane.b32.xlu0 %v522, 96
  %v1934 = vpop.permute.xlu0 %1933
  %v1937 = vmul.f32 %v1711, %v1932
  %v1938 = vmul.f32 %v1713, %v1934
  %1941 = vrot.lane.b32.xlu0 %v1937, 96
  %v1942 = vpop.permute.xlu0 %1941
  %1943 = vrot.lane.b32.xlu0 %v1938, 96
  %v1944 = vpop.permute.xlu0 %1943
  %v1947 = vadd.f32 %v1929, %v1942
  %v1948 = vadd.f32 %v1930, %v1944
  %1951 = vrot.lane.b32.xlu0 %v1947, 64
  %v1952 = vpop.permute.xlu0 %1951
  %1953 = vrot.lane.b32.xlu0 %v1948, 64
  %v1954 = vpop.permute.xlu0 %1953
  %1959 = vrot.lane.b32.xlu0 %v1747, 32
  %v1960 = vpop.permute.xlu0 %1959
  %1961 = vrot.lane.b32.xlu0 %v1748, 32
  %v1962 = vpop.permute.xlu0 %1961
  %1967 = vrot.lane.b32.xlu0 %v1779, 32
  %v1968 = vpop.permute.xlu0 %1967
  %1969 = vrot.lane.b32.xlu0 %v1780, 32
  %v1970 = vpop.permute.xlu0 %1969
  %1975 = vrot.lane.b32.xlu0 %v1815, 32
  %v1976 = vpop.permute.xlu0 %1975
  %1977 = vrot.lane.b32.xlu0 %v1816, 32
  %v1978 = vpop.permute.xlu0 %1977
  %v1981 = vsel %vm422, %v1952, %v1960
  %v1982 = vsel %vm422, %v1954, %v1962
  %v1983 = vsel %vm174, %v1981, %v1968
  %v1984 = vsel %vm174, %v1982, %v1970
  %v1985 = vsel %vm731, %v1983, %v1976
  %v1986 = vsel %vm731, %v1984, %v1978
  %1987 = vst [vmem:[%s6] sm:$0xff] %v1985
  %1988 = vst [vmem:[%s6 + $0x8] sm:$0xff] %v1986
  // Predicated region
  $region26: #{deepdf_update_extended.1} parent=0 // pred_check
    _
  $region27: #{deepdf_update_extended.1} parent=0 // pred_check_branch
    %1990 = sbr.rel (0) target = $region29
  $region28: #{deepdf_update_extended.1} parent=0 // pred_region
    _
  $region29: #{deepdf_update_extended.1} parent=0 // pred_fallthru
    _
  // Predicated region
  $region30: #{deepdf_update_extended.1} parent=0 // pred_check
    _
  $region31: #{deepdf_update_extended.1} parent=0 // pred_check_branch
    %1992 = sbr.rel (0) target = $region33
  $region32: #{deepdf_update_extended.1} parent=0 // pred_region
    _
  $region33: #{deepdf_update_extended.1} parent=0 // pred_fallthru
    _

</llo_original>
